<compile_context>
chip_gen: v7x
topology: tpu7x:2x2x1
jax: 0.10.0
libtpu: 0.0.40
codegen_flags: <defaults>
</compile_context>

<pallas_src>
import functools

import numpy as np

import jax
import jax.numpy as jnp
from jax.experimental import pallas as pl
from jax.experimental.pallas import tpu as pltpu


def _make_divisible(ch, divisor=8, min_ch=None):
    if min_ch is None:
        min_ch = divisor
    new_ch = max(min_ch, int(ch + divisor / 2) // divisor * divisor)
    if new_ch < 0.9 * ch:
        new_ch += divisor
    return new_ch


def _hardswish(x):
    return x * jnp.clip(x + 3.0, 0.0, 6.0) * (1.0 / 6.0)


def _hardsigmoid(x):
    return jnp.clip(x + 3.0, 0.0, 6.0) * (1.0 / 6.0)


def _full_spec(shape):
    nd = len(shape)
    return pl.BlockSpec(shape, lambda i, _nd=nd: (0,) * _nd)


def _lane_shift(y, delta, n):
    # out[:, p] = y[:, (p + delta) % n]; wrapped / row-crossing entries are zeroed
    # by the caller's boundary mask.  (pltpu.roll(y, -delta % n, axis=1) is the
    # XLU form of the same rotation.)
    d = delta % n
    if d == 0:
        return y
    return jnp.concatenate([y[:, d:], y[:, :d]], axis=1)


def _dw_masks(h, w, k, pad):
    # Per-tap validity mask over the flattened spatial axis (f32 0/1), computed
    # once host-side and fed as a tiny input.
    hw = h * w
    pos = np.arange(hw)
    row, col = pos // w, pos % w
    m = np.zeros((k * k, hw), np.float32)
    for kh in range(k):
        for kw in range(k):
            di, dj = kh - pad, kw - pad
            valid = (row + di >= 0) & (row + di < h) & (col + dj >= 0) & (col + dj < w)
            m[kh * k + kw] = valid.astype(np.float32)
    return jnp.asarray(m)


# --------------------- fully fused InvertedResidual kernel ---------------------

def _fused_bneck_kernel(*refs, k, pad, h, w, has_expand, use_se, use_res, use_hs):
    i = 0
    x_ref = refs[i]; i += 1                                    # (1, Cin, HW) f32
    we_ref = b1_ref = None
    if has_expand:
        we_ref, b1_ref = refs[i], refs[i + 1]; i += 2          # (Cexp, Cin), (Cexp, 1)
    wd_ref, b2_ref, mask_ref = refs[i], refs[i + 1], refs[i + 2]; i += 3
    wfc1_ref = bfc1_ref = wfc2t_ref = bfc2_ref = None
    if use_se:
        wfc1_ref, bfc1_ref, wfc2t_ref, bfc2_ref = refs[i:i + 4]; i += 4
    wp_ref, b3_ref = refs[i], refs[i + 1]; i += 2              # (Cout, Cexp), (Cout, 1)
    o_ref = refs[i]                                            # (1, Cout, HW)

    act = _hardswish if use_hs else (lambda v: jnp.maximum(v, 0.0))
    hw = h * w

    x = x_ref[0]                                               # (Cin, HW) f32

    # ---- 1x1 expand conv (+folded BN bias, activation); lane-dense matmul ----
    if has_expand:
        y = act(jnp.dot(we_ref[...], x, preferred_element_type=jnp.float32)
                + b1_ref[...])                                 # (Cexp, HW)
    else:
        y = x

    # ---- depthwise KxK conv (stride 1) via static lane rotations + masks ----
    w_all = wd_ref[...]                                        # (Cexp, k*k), hoisted
    m_all = mask_ref[...]                                      # (k*k, HW) f32 {0,1}
    acc = jnp.zeros_like(y)
    for kh in range(k):
        for kw in range(k):
            idx = kh * k + kw
            delta = (kh - pad) * w + (kw - pad)                # in[p+delta] -> out[p]
            tap = _lane_shift(y, delta, hw) * w_all[:, idx:idx + 1]
            if not (kh == pad and kw == pad):                  # center tap mask == 1
                tap = tap * m_all[idx:idx + 1, :]
            acc = acc + tap
    ydw = act(acc + b2_ref[...])                               # (Cexp, HW)

    # ---- squeeze-excite: global average pool + 2 tiny FCs + channel scale ----
    if use_se:
        pooled = jnp.sum(ydw, axis=1, keepdims=True) * (1.0 / hw)             # (Cexp, 1)
        s1 = jnp.sum(pooled * wfc1_ref[...], axis=0, keepdims=True) + bfc1_ref[...]
        s1 = jnp.maximum(s1, 0.0)                                             # (1, Csq)
        s2 = jnp.sum(wfc2t_ref[...] * s1, axis=1, keepdims=True) + bfc2_ref[...]
        ydw = ydw * _hardsigmoid(s2)                                          # (Cexp, HW)

    # ---- 1x1 project conv (+folded BN) + residual; lane-dense NCHW-flat store ----
    out = jnp.dot(wp_ref[...], ydw, preferred_element_type=jnp.float32) + b3_ref[...]
    if use_res:
        out = out + x                                          # f32 identity (parity)
    o_ref[0] = out.astype(o_ref.dtype)


# ------------------------------------- wrapper ------------------------------------------

def inverted_residual_forward(x_nchw, params, cnf):
    n, cin, h, w = x_nchw.shape
    cexp, cout = cnf["expanded_c"], cnf["out_c"]
    k, stride = cnf["kernel"], cnf["stride"]
    use_hs, use_se = cnf["use_hs"], cnf["use_se"]
    assert stride == 1  # TODO(synk): stride=2 depthwise downsampling path not implemented
    pad = (k - 1) // 2
    hw = h * w
    has_expand = cexp != cin
    use_res = (stride == 1) and (cin == cout)
    f32 = jnp.float32

    # NCHW with flattened spatial on lanes: no transposes anywhere, only reshapes.
    x_flat = x_nchw.reshape(n, cin, hw).astype(f32)

    # Fold eval-mode BN scales into conv weights host-side; biases as columns.
    w_exp_t = (params["w_exp"] * params["bn1_scale"][None, :]).T.astype(f32)       # (Cexp, Cin)
    b1 = params["bn1_bias"].reshape(cexp, 1).astype(f32)
    w_dw_t = (params["w_dw"] * params["bn2_scale"][None, None, :]) \
        .reshape(k * k, cexp).T.astype(f32)                                        # (Cexp, k*k)
    b2 = params["bn2_bias"].reshape(cexp, 1).astype(f32)
    w_proj_t = (params["w_proj"] * params["bn3_scale"][None, :]).T.astype(f32)     # (Cout, Cexp)
    b3 = params["bn3_bias"].reshape(cout, 1).astype(f32)
    dw_mask = _dw_masks(h, w, k, pad)                                              # (k*k, HW)

    in_specs = [pl.BlockSpec((1, cin, hw), lambda i: (i, 0, 0))]
    args = [x_flat]
    if has_expand:
        in_specs += [_full_spec((cexp, cin)), _full_spec((cexp, 1))]
        args += [w_exp_t, b1]
    in_specs += [_full_spec((cexp, k * k)), _full_spec((cexp, 1)), _full_spec((k * k, hw))]
    args += [w_dw_t, b2, dw_mask]
    if use_se:
        csq = params["w_fc1"].shape[1]
        w_fc1 = params["w_fc1"].astype(f32)                                        # (Cexp, Csq)
        b_fc1 = params["b_fc1"].reshape(1, csq).astype(f32)
        w_fc2_t = params["w_fc2"].T.astype(f32)                                    # (Cexp, Csq)
        b_fc2 = params["b_fc2"].reshape(cexp, 1).astype(f32)
        in_specs += [_full_spec((cexp, csq)), _full_spec((1, csq)),
                     _full_spec((cexp, csq)), _full_spec((cexp, 1))]
        args += [w_fc1, b_fc1, w_fc2_t, b_fc2]
    in_specs += [_full_spec((cout, cexp)), _full_spec((cout, 1))]
    args += [w_proj_t, b3]

    # TODO(synk): batch-tile (>=2 images per grid step) to amortize the ~0.35us
    # per-step overhead for larger batches; n=2 here already keeps both v7x TCs busy.
    out_flat = pl.pallas_call(
        functools.partial(_fused_bneck_kernel, k=k, pad=pad, h=h, w=w,
                          has_expand=has_expand, use_se=use_se,
                          use_res=use_res, use_hs=use_hs),
        grid=(n,),
        in_specs=in_specs,
        out_specs=pl.BlockSpec((1, cout, hw), lambda i: (i, 0, 0)),
        out_shape=jax.ShapeDtypeStruct((n, cout, hw), jnp.float32),
        compiler_params=pltpu.CompilerParams(
            dimension_semantics=("parallel",),   # batch axis shards across TCs on v7x
        ),
    )(*args)

    return out_flat.reshape(n, cout, h, w)       # already NCHW; reshape is free


# ------------------------- parameters (deterministic) -------------------------

def make_params(key, cin, cexp, cout, csq, k, eps=1e-3):
    ks = jax.random.split(key, 19)

    def _bn(i, c):
        gamma = 1.0 + 0.1 * jax.random.normal(ks[i], (c,), jnp.float32)
        beta = 0.1 * jax.random.normal(ks[i + 1], (c,), jnp.float32)
        mean = 0.1 * jax.random.normal(ks[i + 2], (c,), jnp.float32)
        var = jax.random.uniform(ks[i + 3], (c,), jnp.float32, 0.5, 1.5)
        scale = gamma * jax.lax.rsqrt(var + eps)
        bias = beta - mean * scale
        return scale, bias

    p = {}
    p["w_exp"] = 0.2 * jax.random.normal(ks[12], (cin, cexp), jnp.float32)     # (Cin, Cexp)
    p["bn1_scale"], p["bn1_bias"] = _bn(0, cexp)
    p["w_dw"] = 0.2 * jax.random.normal(ks[13], (k, k, cexp), jnp.float32)     # (K, K, Cexp)
    p["bn2_scale"], p["bn2_bias"] = _bn(4, cexp)
    p["w_fc1"] = 0.2 * jax.random.normal(ks[14], (cexp, csq), jnp.float32)
    p["b_fc1"] = 0.1 * jax.random.normal(ks[15], (csq,), jnp.float32)
    p["w_fc2"] = 0.2 * jax.random.normal(ks[16], (csq, cexp), jnp.float32)
    p["b_fc2"] = 0.1 * jax.random.normal(ks[17], (cexp,), jnp.float32)
    p["w_proj"] = 0.2 * jax.random.normal(ks[18], (cexp, cout), jnp.float32)   # (Cexp, Cout)
    p["bn3_scale"], p["bn3_bias"] = _bn(8, cout)
    return p


# ----------------------------- pure-JAX f32 reference -----------------------------

def reference_forward(x_nchw, p, cnf):
    x = jnp.transpose(x_nchw, (0, 2, 3, 1)).astype(jnp.float32)
    n, h, w, cin = x.shape
    cexp, cout, k = cnf["expanded_c"], cnf["out_c"], cnf["kernel"]
    act = _hardswish if cnf["use_hs"] else (lambda v: jnp.maximum(v, 0.0))
    y = x
    if cexp != cin:
        y = act(jnp.einsum("nhwc,cd->nhwd", x, p["w_exp"]) * p["bn1_scale"] + p["bn1_bias"])
    pad = (k - 1) // 2
    yp = jnp.pad(y, ((0, 0), (pad, pad), (pad, pad), (0, 0)))
    acc = jnp.zeros((n, h, w, cexp), jnp.float32)
    for kh in range(k):
        for kw in range(k):
            acc = acc + yp[:, kh:kh + h, kw:kw + w, :] * p["w_dw"][kh, kw]
    y = act(acc * p["bn2_scale"] + p["bn2_bias"])
    if cnf["use_se"]:
        pooled = jnp.mean(y, axis=(1, 2))
        s = jnp.maximum(pooled @ p["w_fc1"] + p["b_fc1"], 0.0)
        s = _hardsigmoid(s @ p["w_fc2"] + p["b_fc2"])
        y = y * s[:, None, None, :]
    out = jnp.einsum("nhwc,cd->nhwd", y, p["w_proj"]) * p["bn3_scale"] + p["bn3_bias"]
    if cnf["stride"] == 1 and cin == cout:
        out = out + x
    return jnp.transpose(out, (0, 3, 1, 2))


if __name__ == "__main__":
    width_multi = 1.0
    input_c = _make_divisible(16 * width_multi)       # 16
    expanded_c = _make_divisible(64 * width_multi)    # 64
    out_c = _make_divisible(16 * width_multi)         # 16
    squeeze_c = _make_divisible(expanded_c // 4)      # 16
    cnf = dict(input_c=input_c, expanded_c=expanded_c, out_c=out_c,
               kernel=3, stride=1, use_se=True, use_hs=True)

    key = jax.random.PRNGKey(0)
    kx, kp = jax.random.split(key)
    x = jax.random.normal(kx, (2, input_c, 16, 16), jnp.float32)    # NCHW, like PyTorch
    params = make_params(kp, input_c, expanded_c, out_c, squeeze_c, cnf["kernel"])

    fwd = jax.jit(functools.partial(inverted_residual_forward, cnf=cnf))
    out = jax.block_until_ready(fwd(x, params))

    ref = reference_forward(x, params, cnf)
    err = float(jnp.max(jnp.abs(out - ref)))
    scale = float(jnp.max(jnp.abs(ref))) + 1e-6
    assert out.shape == (2, out_c, 16, 16), out.shape
    # Tolerance covers TPU default (reduced-precision) matmul rounding in the
    # reference einsums vs. the kernel's f32 MXU accumulation; real bugs
    # (wrong tap / mask / bias / fold) would be >10x larger.
    assert err / scale < 4e-2, f"mismatch vs f32 reference: abs={err} rel={err / scale}"
    print("KERNEL_OK")
</pallas_src>

<mosaic_0001>
module attributes {stable_mosaic.version = 11 : i64} {
  func.func @_fused_bneck_kernel(%arg0: i32, %arg1: memref<1x16x256xf32, #tpu.memory_space<vmem>>, %arg2: memref<64x16xf32, #tpu.memory_space<vmem>>, %arg3: memref<64x1xf32, #tpu.memory_space<vmem>>, %arg4: memref<64x9xf32, #tpu.memory_space<vmem>>, %arg5: memref<64x1xf32, #tpu.memory_space<vmem>>, %arg6: memref<9x256xf32, #tpu.memory_space<vmem>>, %arg7: memref<64x16xf32, #tpu.memory_space<vmem>>, %arg8: memref<1x16xf32, #tpu.memory_space<vmem>>, %arg9: memref<64x16xf32, #tpu.memory_space<vmem>>, %arg10: memref<64x1xf32, #tpu.memory_space<vmem>>, %arg11: memref<16x64xf32, #tpu.memory_space<vmem>>, %arg12: memref<16x1xf32, #tpu.memory_space<vmem>>, %arg13: memref<1x16x256xf32, #tpu.memory_space<vmem>>) attributes {dimension_semantics = [#tpu.dimension_semantics<parallel>], iteration_bounds = array<i64: 2>, scalar_prefetch = 0 : i64, scratch_operands = 0 : i64, tpu.core_type = #tpu.core_type<tc>, window_params = [{transform_indices = @transform_0, window_bounds = array<i64: 1, 16, 256>}, {pipeline_mode = #tpu.pipeline_mode<synchronous>, transform_indices = @transform_1, window_bounds = array<i64: 64, 16>}, {pipeline_mode = #tpu.pipeline_mode<synchronous>, transform_indices = @transform_2, window_bounds = array<i64: 64, 1>}, {pipeline_mode = #tpu.pipeline_mode<synchronous>, transform_indices = @transform_3, window_bounds = array<i64: 64, 9>}, {pipeline_mode = #tpu.pipeline_mode<synchronous>, transform_indices = @transform_4, window_bounds = array<i64: 64, 1>}, {pipeline_mode = #tpu.pipeline_mode<synchronous>, transform_indices = @transform_5, window_bounds = array<i64: 9, 256>}, {pipeline_mode = #tpu.pipeline_mode<synchronous>, transform_indices = @transform_6, window_bounds = array<i64: 64, 16>}, {pipeline_mode = #tpu.pipeline_mode<synchronous>, transform_indices = @transform_7, window_bounds = array<i64: 1, 16>}, {pipeline_mode = #tpu.pipeline_mode<synchronous>, transform_indices = @transform_8, window_bounds = array<i64: 64, 16>}, {pipeline_mode = #tpu.pipeline_mode<synchronous>, transform_indices = @transform_9, window_bounds = array<i64: 64, 1>}, {pipeline_mode = #tpu.pipeline_mode<synchronous>, transform_indices = @transform_10, window_bounds = array<i64: 16, 64>}, {pipeline_mode = #tpu.pipeline_mode<synchronous>, transform_indices = @transform_11, window_bounds = array<i64: 16, 1>}, {transform_indices = @transform_12, window_bounds = array<i64: 1, 16, 256>}]} {
    %c0 = arith.constant 0 : index
    %c0_0 = arith.constant 0 : index
    %c0_1 = arith.constant 0 : index
    %0 = vector.load %arg1[%c0, %c0_0, %c0_1] : memref<1x16x256xf32, #tpu.memory_space<vmem>>, vector<1x16x256xf32>
    %1 = vector.shape_cast %0 : vector<1x16x256xf32> to vector<16x256xf32>
    %c0_2 = arith.constant 0 : index
    %c0_3 = arith.constant 0 : index
    %2 = vector.load %arg2[%c0_2, %c0_3] : memref<64x16xf32, #tpu.memory_space<vmem>>, vector<64x16xf32>
    %cst = arith.constant dense<0.000000e+00> : vector<64x256xf32>
    %3 = tpu.matmul %2, %1, %cst {dimension_numbers = #tpu.dot_dimension_numbers<[1], [0], [0], [1], [0, 0, 1, 1], [], []>} : vector<64x16xf32>, vector<16x256xf32>, vector<64x256xf32> -> vector<64x256xf32>
    %c0_4 = arith.constant 0 : index
    %c0_5 = arith.constant 0 : index
    %4 = vector.load %arg3[%c0_4, %c0_5] : memref<64x1xf32, #tpu.memory_space<vmem>>, vector<64x1xf32>
    %5 = vector.broadcast %4 : vector<64x1xf32> to vector<64x256xf32>
    %6 = arith.addf %3, %5 : vector<64x256xf32>
    %cst_6 = arith.constant 3.000000e+00 : f32
    %7 = vector.broadcast %cst_6 : f32 to vector<64x256xf32>
    %8 = arith.addf %6, %7 : vector<64x256xf32>
    %cst_7 = arith.constant 0.000000e+00 : f32
    %cst_8 = arith.constant 6.000000e+00 : f32
    %9 = vector.broadcast %cst_7 : f32 to vector<64x256xf32>
    %10 = arith.maximumf %9, %8 : vector<64x256xf32>
    %11 = vector.broadcast %cst_8 : f32 to vector<64x256xf32>
    %12 = arith.minimumf %11, %10 : vector<64x256xf32>
    %13 = arith.mulf %6, %12 : vector<64x256xf32>
    %cst_9 = arith.constant 0.166666672 : f32
    %14 = vector.broadcast %cst_9 : f32 to vector<64x256xf32>
    %15 = arith.mulf %13, %14 : vector<64x256xf32>
    %c0_10 = arith.constant 0 : index
    %c0_11 = arith.constant 0 : index
    %16 = vector.load %arg4[%c0_10, %c0_11] : memref<64x9xf32, #tpu.memory_space<vmem>>, vector<64x9xf32>
    %c0_12 = arith.constant 0 : index
    %c0_13 = arith.constant 0 : index
    %17 = vector.load %arg6[%c0_12, %c0_13] : memref<9x256xf32, #tpu.memory_space<vmem>>, vector<9x256xf32>
    %cst_14 = arith.constant 0.000000e+00 : f32
    %18 = vector.broadcast %cst_14 : f32 to vector<64x256xf32>
    %19 = vector.extract_strided_slice %15 {offsets = [0, 239], sizes = [64, 17], strides = [1, 1]} : vector<64x256xf32> to vector<64x17xf32>
    %20 = vector.extract_strided_slice %15 {offsets = [0, 0], sizes = [64, 239], strides = [1, 1]} : vector<64x256xf32> to vector<64x239xf32>
    %21 = tpu.concatenate %19, %20 in 1 : vector<64x17xf32>, vector<64x239xf32> -> vector<64x256xf32>
    %22 = vector.extract_strided_slice %16 {offsets = [0, 0], sizes = [64, 1], strides = [1, 1]} : vector<64x9xf32> to vector<64x1xf32>
    %23 = vector.broadcast %22 : vector<64x1xf32> to vector<64x256xf32>
    %24 = arith.mulf %21, %23 : vector<64x256xf32>
    %25 = vector.extract_strided_slice %17 {offsets = [0, 0], sizes = [1, 256], strides = [1, 1]} : vector<9x256xf32> to vector<1x256xf32>
    %26 = vector.broadcast %25 : vector<1x256xf32> to vector<64x256xf32>
    %27 = arith.mulf %24, %26 : vector<64x256xf32>
    %28 = arith.addf %18, %27 : vector<64x256xf32>
    %29 = vector.extract_strided_slice %15 {offsets = [0, 240], sizes = [64, 16], strides = [1, 1]} : vector<64x256xf32> to vector<64x16xf32>
    %30 = vector.extract_strided_slice %15 {offsets = [0, 0], sizes = [64, 240], strides = [1, 1]} : vector<64x256xf32> to vector<64x240xf32>
    %31 = tpu.concatenate %29, %30 in 1 : vector<64x16xf32>, vector<64x240xf32> -> vector<64x256xf32>
    %32 = vector.extract_strided_slice %16 {offsets = [0, 1], sizes = [64, 1], strides = [1, 1]} : vector<64x9xf32> to vector<64x1xf32>
    %33 = vector.broadcast %32 : vector<64x1xf32> to vector<64x256xf32>
    %34 = arith.mulf %31, %33 : vector<64x256xf32>
    %35 = vector.extract_strided_slice %17 {offsets = [1, 0], sizes = [1, 256], strides = [1, 1]} : vector<9x256xf32> to vector<1x256xf32>
    %36 = vector.broadcast %35 : vector<1x256xf32> to vector<64x256xf32>
    %37 = arith.mulf %34, %36 : vector<64x256xf32>
    %38 = arith.addf %28, %37 : vector<64x256xf32>
    %39 = vector.extract_strided_slice %15 {offsets = [0, 241], sizes = [64, 15], strides = [1, 1]} : vector<64x256xf32> to vector<64x15xf32>
    %40 = vector.extract_strided_slice %15 {offsets = [0, 0], sizes = [64, 241], strides = [1, 1]} : vector<64x256xf32> to vector<64x241xf32>
    %41 = tpu.concatenate %39, %40 in 1 : vector<64x15xf32>, vector<64x241xf32> -> vector<64x256xf32>
    %42 = vector.extract_strided_slice %16 {offsets = [0, 2], sizes = [64, 1], strides = [1, 1]} : vector<64x9xf32> to vector<64x1xf32>
    %43 = vector.broadcast %42 : vector<64x1xf32> to vector<64x256xf32>
    %44 = arith.mulf %41, %43 : vector<64x256xf32>
    %45 = vector.extract_strided_slice %17 {offsets = [2, 0], sizes = [1, 256], strides = [1, 1]} : vector<9x256xf32> to vector<1x256xf32>
    %46 = vector.broadcast %45 : vector<1x256xf32> to vector<64x256xf32>
    %47 = arith.mulf %44, %46 : vector<64x256xf32>
    %48 = arith.addf %38, %47 : vector<64x256xf32>
    %49 = vector.extract_strided_slice %15 {offsets = [0, 255], sizes = [64, 1], strides = [1, 1]} : vector<64x256xf32> to vector<64x1xf32>
    %50 = vector.extract_strided_slice %15 {offsets = [0, 0], sizes = [64, 255], strides = [1, 1]} : vector<64x256xf32> to vector<64x255xf32>
    %51 = tpu.concatenate %49, %50 in 1 : vector<64x1xf32>, vector<64x255xf32> -> vector<64x256xf32>
    %52 = vector.extract_strided_slice %16 {offsets = [0, 3], sizes = [64, 1], strides = [1, 1]} : vector<64x9xf32> to vector<64x1xf32>
    %53 = vector.broadcast %52 : vector<64x1xf32> to vector<64x256xf32>
    %54 = arith.mulf %51, %53 : vector<64x256xf32>
    %55 = vector.extract_strided_slice %17 {offsets = [3, 0], sizes = [1, 256], strides = [1, 1]} : vector<9x256xf32> to vector<1x256xf32>
    %56 = vector.broadcast %55 : vector<1x256xf32> to vector<64x256xf32>
    %57 = arith.mulf %54, %56 : vector<64x256xf32>
    %58 = arith.addf %48, %57 : vector<64x256xf32>
    %59 = vector.extract_strided_slice %16 {offsets = [0, 4], sizes = [64, 1], strides = [1, 1]} : vector<64x9xf32> to vector<64x1xf32>
    %60 = vector.broadcast %59 : vector<64x1xf32> to vector<64x256xf32>
    %61 = arith.mulf %15, %60 : vector<64x256xf32>
    %62 = arith.addf %58, %61 : vector<64x256xf32>
    %63 = vector.extract_strided_slice %15 {offsets = [0, 1], sizes = [64, 255], strides = [1, 1]} : vector<64x256xf32> to vector<64x255xf32>
    %64 = vector.extract_strided_slice %15 {offsets = [0, 0], sizes = [64, 1], strides = [1, 1]} : vector<64x256xf32> to vector<64x1xf32>
    %65 = tpu.concatenate %63, %64 in 1 : vector<64x255xf32>, vector<64x1xf32> -> vector<64x256xf32>
    %66 = vector.extract_strided_slice %16 {offsets = [0, 5], sizes = [64, 1], strides = [1, 1]} : vector<64x9xf32> to vector<64x1xf32>
    %67 = vector.broadcast %66 : vector<64x1xf32> to vector<64x256xf32>
    %68 = arith.mulf %65, %67 : vector<64x256xf32>
    %69 = vector.extract_strided_slice %17 {offsets = [5, 0], sizes = [1, 256], strides = [1, 1]} : vector<9x256xf32> to vector<1x256xf32>
    %70 = vector.broadcast %69 : vector<1x256xf32> to vector<64x256xf32>
    %71 = arith.mulf %68, %70 : vector<64x256xf32>
    %72 = arith.addf %62, %71 : vector<64x256xf32>
    %73 = vector.extract_strided_slice %15 {offsets = [0, 15], sizes = [64, 241], strides = [1, 1]} : vector<64x256xf32> to vector<64x241xf32>
    %74 = vector.extract_strided_slice %15 {offsets = [0, 0], sizes = [64, 15], strides = [1, 1]} : vector<64x256xf32> to vector<64x15xf32>
    %75 = tpu.concatenate %73, %74 in 1 : vector<64x241xf32>, vector<64x15xf32> -> vector<64x256xf32>
    %76 = vector.extract_strided_slice %16 {offsets = [0, 6], sizes = [64, 1], strides = [1, 1]} : vector<64x9xf32> to vector<64x1xf32>
    %77 = vector.broadcast %76 : vector<64x1xf32> to vector<64x256xf32>
    %78 = arith.mulf %75, %77 : vector<64x256xf32>
    %79 = vector.extract_strided_slice %17 {offsets = [6, 0], sizes = [1, 256], strides = [1, 1]} : vector<9x256xf32> to vector<1x256xf32>
    %80 = vector.broadcast %79 : vector<1x256xf32> to vector<64x256xf32>
    %81 = arith.mulf %78, %80 : vector<64x256xf32>
    %82 = arith.addf %72, %81 : vector<64x256xf32>
    %83 = vector.extract_strided_slice %15 {offsets = [0, 16], sizes = [64, 240], strides = [1, 1]} : vector<64x256xf32> to vector<64x240xf32>
    %84 = vector.extract_strided_slice %15 {offsets = [0, 0], sizes = [64, 16], strides = [1, 1]} : vector<64x256xf32> to vector<64x16xf32>
    %85 = tpu.concatenate %83, %84 in 1 : vector<64x240xf32>, vector<64x16xf32> -> vector<64x256xf32>
    %86 = vector.extract_strided_slice %16 {offsets = [0, 7], sizes = [64, 1], strides = [1, 1]} : vector<64x9xf32> to vector<64x1xf32>
    %87 = vector.broadcast %86 : vector<64x1xf32> to vector<64x256xf32>
    %88 = arith.mulf %85, %87 : vector<64x256xf32>
    %89 = vector.extract_strided_slice %17 {offsets = [7, 0], sizes = [1, 256], strides = [1, 1]} : vector<9x256xf32> to vector<1x256xf32>
    %90 = vector.broadcast %89 : vector<1x256xf32> to vector<64x256xf32>
    %91 = arith.mulf %88, %90 : vector<64x256xf32>
    %92 = arith.addf %82, %91 : vector<64x256xf32>
    %93 = vector.extract_strided_slice %15 {offsets = [0, 17], sizes = [64, 239], strides = [1, 1]} : vector<64x256xf32> to vector<64x239xf32>
    %94 = vector.extract_strided_slice %15 {offsets = [0, 0], sizes = [64, 17], strides = [1, 1]} : vector<64x256xf32> to vector<64x17xf32>
    %95 = tpu.concatenate %93, %94 in 1 : vector<64x239xf32>, vector<64x17xf32> -> vector<64x256xf32>
    %96 = vector.extract_strided_slice %16 {offsets = [0, 8], sizes = [64, 1], strides = [1, 1]} : vector<64x9xf32> to vector<64x1xf32>
    %97 = vector.broadcast %96 : vector<64x1xf32> to vector<64x256xf32>
    %98 = arith.mulf %95, %97 : vector<64x256xf32>
    %99 = vector.extract_strided_slice %17 {offsets = [8, 0], sizes = [1, 256], strides = [1, 1]} : vector<9x256xf32> to vector<1x256xf32>
    %100 = vector.broadcast %99 : vector<1x256xf32> to vector<64x256xf32>
    %101 = arith.mulf %98, %100 : vector<64x256xf32>
    %102 = arith.addf %92, %101 : vector<64x256xf32>
    %c0_15 = arith.constant 0 : index
    %c0_16 = arith.constant 0 : index
    %103 = vector.load %arg5[%c0_15, %c0_16] : memref<64x1xf32, #tpu.memory_space<vmem>>, vector<64x1xf32>
    %104 = vector.broadcast %103 : vector<64x1xf32> to vector<64x256xf32>
    %105 = arith.addf %102, %104 : vector<64x256xf32>
    %cst_17 = arith.constant 3.000000e+00 : f32
    %106 = vector.broadcast %cst_17 : f32 to vector<64x256xf32>
    %107 = arith.addf %105, %106 : vector<64x256xf32>
    %cst_18 = arith.constant 0.000000e+00 : f32
    %cst_19 = arith.constant 6.000000e+00 : f32
    %108 = vector.broadcast %cst_18 : f32 to vector<64x256xf32>
    %109 = arith.maximumf %108, %107 : vector<64x256xf32>
    %110 = vector.broadcast %cst_19 : f32 to vector<64x256xf32>
    %111 = arith.minimumf %110, %109 : vector<64x256xf32>
    %112 = arith.mulf %105, %111 : vector<64x256xf32>
    %cst_20 = arith.constant 0.166666672 : f32
    %113 = vector.broadcast %cst_20 : f32 to vector<64x256xf32>
    %114 = arith.mulf %112, %113 : vector<64x256xf32>
    %cst_21 = arith.constant dense<0.000000e+00> : vector<64xf32>
    %115 = vector.multi_reduction <add>, %114, %cst_21 [1] : vector<64x256xf32> to vector<64xf32>
    %116 = vector.shape_cast %115 : vector<64xf32> to vector<64x1xf32>
    %cst_22 = arith.constant 3.906250e-03 : f32
    %117 = vector.broadcast %cst_22 : f32 to vector<64x1xf32>
    %118 = arith.mulf %116, %117 : vector<64x1xf32>
    %c0_23 = arith.constant 0 : index
    %c0_24 = arith.constant 0 : index
    %119 = vector.load %arg7[%c0_23, %c0_24] : memref<64x16xf32, #tpu.memory_space<vmem>>, vector<64x16xf32>
    %120 = vector.broadcast %118 : vector<64x1xf32> to vector<64x16xf32>
    %121 = arith.mulf %120, %119 : vector<64x16xf32>
    %cst_25 = arith.constant dense<0.000000e+00> : vector<16xf32>
    %122 = vector.multi_reduction <add>, %121, %cst_25 [0] : vector<64x16xf32> to vector<16xf32>
    %123 = vector.shape_cast %122 : vector<16xf32> to vector<1x16xf32>
    %c0_26 = arith.constant 0 : index
    %c0_27 = arith.constant 0 : index
    %124 = vector.load %arg8[%c0_26, %c0_27] : memref<1x16xf32, #tpu.memory_space<vmem>>, vector<1x16xf32>
    %125 = arith.addf %123, %124 : vector<1x16xf32>
    %cst_28 = arith.constant 0.000000e+00 : f32
    %126 = vector.broadcast %cst_28 : f32 to vector<1x16xf32>
    %127 = arith.maximumf %125, %126 : vector<1x16xf32>
    %c0_29 = arith.constant 0 : index
    %c0_30 = arith.constant 0 : index
    %128 = vector.load %arg9[%c0_29, %c0_30] : memref<64x16xf32, #tpu.memory_space<vmem>>, vector<64x16xf32>
    %129 = vector.broadcast %127 : vector<1x16xf32> to vector<64x16xf32>
    %130 = arith.mulf %128, %129 : vector<64x16xf32>
    %cst_31 = arith.constant dense<0.000000e+00> : vector<64xf32>
    %131 = vector.multi_reduction <add>, %130, %cst_31 [1] : vector<64x16xf32> to vector<64xf32>
    %132 = vector.shape_cast %131 : vector<64xf32> to vector<64x1xf32>
    %c0_32 = arith.constant 0 : index
    %c0_33 = arith.constant 0 : index
    %133 = vector.load %arg10[%c0_32, %c0_33] : memref<64x1xf32, #tpu.memory_space<vmem>>, vector<64x1xf32>
    %134 = arith.addf %132, %133 : vector<64x1xf32>
    %cst_34 = arith.constant 3.000000e+00 : f32
    %135 = vector.broadcast %cst_34 : f32 to vector<64x1xf32>
    %136 = arith.addf %134, %135 : vector<64x1xf32>
    %cst_35 = arith.constant 0.000000e+00 : f32
    %cst_36 = arith.constant 6.000000e+00 : f32
    %137 = vector.broadcast %cst_35 : f32 to vector<64x1xf32>
    %138 = arith.maximumf %137, %136 : vector<64x1xf32>
    %139 = vector.broadcast %cst_36 : f32 to vector<64x1xf32>
    %140 = arith.minimumf %139, %138 : vector<64x1xf32>
    %cst_37 = arith.constant 0.166666672 : f32
    %141 = vector.broadcast %cst_37 : f32 to vector<64x1xf32>
    %142 = arith.mulf %140, %141 : vector<64x1xf32>
    %143 = vector.broadcast %142 : vector<64x1xf32> to vector<64x256xf32>
    %144 = arith.mulf %114, %143 : vector<64x256xf32>
    %c0_38 = arith.constant 0 : index
    %c0_39 = arith.constant 0 : index
    %145 = vector.load %arg11[%c0_38, %c0_39] : memref<16x64xf32, #tpu.memory_space<vmem>>, vector<16x64xf32>
    %cst_40 = arith.constant dense<0.000000e+00> : vector<16x256xf32>
    %146 = tpu.matmul %145, %144, %cst_40 {dimension_numbers = #tpu.dot_dimension_numbers<[1], [0], [0], [1], [0, 0, 1, 1], [], []>} : vector<16x64xf32>, vector<64x256xf32>, vector<16x256xf32> -> vector<16x256xf32>
    %c0_41 = arith.constant 0 : index
    %c0_42 = arith.constant 0 : index
    %147 = vector.load %arg12[%c0_41, %c0_42] : memref<16x1xf32, #tpu.memory_space<vmem>>, vector<16x1xf32>
    %148 = vector.broadcast %147 : vector<16x1xf32> to vector<16x256xf32>
    %149 = arith.addf %146, %148 : vector<16x256xf32>
    %150 = arith.addf %149, %1 : vector<16x256xf32>
    %c0_43 = arith.constant 0 : index
    %c0_44 = arith.constant 0 : index
    %c0_45 = arith.constant 0 : index
    %151 = vector.load %arg13[%c0_43, %c0_44, %c0_45] : memref<1x16x256xf32, #tpu.memory_space<vmem>>, vector<1x16x256xf32>
    %152 = vector.shape_cast %151 : vector<1x16x256xf32> to vector<16x256xf32>
    %153 = vector.shape_cast %150 : vector<16x256xf32> to vector<1x16x256xf32>
    tpu.vector_store %arg13[%c0_43, %c0_44, %c0_45], %153 {strides = array<i32>} : memref<1x16x256xf32, #tpu.memory_space<vmem>>, vector<1x16x256xf32>,
    return
  }
  func.func @transform_0(%arg0: i32) -> (i32, i32, i32) {
    %c0_i32 = arith.constant 0 : i32
    %c0_i32_0 = arith.constant 0 : i32
    %c0_i32_1 = arith.constant 0 : i32
    return %arg0, %c0_i32, %c0_i32_0 : i32, i32, i32
  }
  func.func @transform_1(%arg0: i32) -> (i32, i32) {
    %c0_i32 = arith.constant 0 : i32
    %c0_i32_0 = arith.constant 0 : i32
    %c0_i32_1 = arith.constant 0 : i32
    return %c0_i32, %c0_i32_0 : i32, i32
  }
  func.func @transform_2(%arg0: i32) -> (i32, i32) {
    %c0_i32 = arith.constant 0 : i32
    %c0_i32_0 = arith.constant 0 : i32
    %c0_i32_1 = arith.constant 0 : i32
    return %c0_i32, %c0_i32_0 : i32, i32
  }
  func.func @transform_3(%arg0: i32) -> (i32, i32) {
    %c0_i32 = arith.constant 0 : i32
    %c0_i32_0 = arith.constant 0 : i32
    %c0_i32_1 = arith.constant 0 : i32
    return %c0_i32, %c0_i32_0 : i32, i32
  }
  func.func @transform_4(%arg0: i32) -> (i32, i32) {
    %c0_i32 = arith.constant 0 : i32
    %c0_i32_0 = arith.constant 0 : i32
    %c0_i32_1 = arith.constant 0 : i32
    return %c0_i32, %c0_i32_0 : i32, i32
  }
  func.func @transform_5(%arg0: i32) -> (i32, i32) {
    %c0_i32 = arith.constant 0 : i32
    %c0_i32_0 = arith.constant 0 : i32
    %c0_i32_1 = arith.constant 0 : i32
    return %c0_i32, %c0_i32_0 : i32, i32
  }
  func.func @transform_6(%arg0: i32) -> (i32, i32) {
    %c0_i32 = arith.constant 0 : i32
    %c0_i32_0 = arith.constant 0 : i32
    %c0_i32_1 = arith.constant 0 : i32
    return %c0_i32, %c0_i32_0 : i32, i32
  }
  func.func @transform_7(%arg0: i32) -> (i32, i32) {
    %c0_i32 = arith.constant 0 : i32
    %c0_i32_0 = arith.constant 0 : i32
    %c0_i32_1 = arith.constant 0 : i32
    return %c0_i32, %c0_i32_0 : i32, i32
  }
  func.func @transform_8(%arg0: i32) -> (i32, i32) {
    %c0_i32 = arith.constant 0 : i32
    %c0_i32_0 = arith.constant 0 : i32
    %c0_i32_1 = arith.constant 0 : i32
    return %c0_i32, %c0_i32_0 : i32, i32
  }
  func.func @transform_9(%arg0: i32) -> (i32, i32) {
    %c0_i32 = arith.constant 0 : i32
    %c0_i32_0 = arith.constant 0 : i32
    %c0_i32_1 = arith.constant 0 : i32
    return %c0_i32, %c0_i32_0 : i32, i32
  }
  func.func @transform_10(%arg0: i32) -> (i32, i32) {
    %c0_i32 = arith.constant 0 : i32
    %c0_i32_0 = arith.constant 0 : i32
    %c0_i32_1 = arith.constant 0 : i32
    return %c0_i32, %c0_i32_0 : i32, i32
  }
  func.func @transform_11(%arg0: i32) -> (i32, i32) {
    %c0_i32 = arith.constant 0 : i32
    %c0_i32_0 = arith.constant 0 : i32
    %c0_i32_1 = arith.constant 0 : i32
    return %c0_i32, %c0_i32_0 : i32, i32
  }
  func.func @transform_12(%arg0: i32) -> (i32, i32, i32) {
    %c0_i32 = arith.constant 0 : i32
    %c0_i32_0 = arith.constant 0 : i32
    %c0_i32_1 = arith.constant 0 : i32
    return %arg0, %c0_i32, %c0_i32_0 : i32, i32, i32
  }
}

</mosaic_0001>

<llo_original>
// kernel: inverted_residual_forward.1
$region0: #{inverted_residual_forward.1}
  #allocation0 [shape = 'u32[]', space=smem, size = 0x4, offset = 0x4, fixed_abs, tag = 'smem constant byte address 0x4 - core index']
  #allocation1 [shape = 'u32[144,128]{1,0:T(1,128)}', space=vmem, size = 0x12000, scoped, tag = 'internal scratch']
  %s0 = inlined_call_operand.vmem [shape: f32[2,16,256], index: 0, kind: input, shape index: {}]
  %s1 = inlined_call_operand.vmem [shape: f32[64,16], index: 1, kind: input, shape index: {}]
  %s2 = inlined_call_operand.vmem [shape: f32[64,1], index: 2, kind: input, shape index: {}]
  %s3 = inlined_call_operand.vmem [shape: f32[64,9], index: 3, kind: input, shape index: {}]
  %s4 = inlined_call_operand.vmem [shape: f32[64,1], index: 4, kind: input, shape index: {}]
  %s5 = inlined_call_operand.vmem [shape: f32[9,256], index: 5, kind: input, shape index: {}]
  %s6 = inlined_call_operand.vmem [shape: f32[64,16], index: 6, kind: input, shape index: {}]
  %s7 = inlined_call_operand.vmem [shape: f32[1,16], index: 7, kind: input, shape index: {}]
  %s8 = inlined_call_operand.vmem [shape: f32[64,16], index: 8, kind: input, shape index: {}]
  %s9 = inlined_call_operand.vmem [shape: f32[64,1], index: 9, kind: input, shape index: {}]
  %s10 = inlined_call_operand.vmem [shape: f32[16,64], index: 10, kind: input, shape index: {}]
  %s11 = inlined_call_operand.vmem [shape: f32[16,1], index: 11, kind: input, shape index: {}]
  %s12 = inlined_call_operand.vmem [shape: f32[2,16,256], index: 12, kind: output, shape index: {}]
  %s13 = sld [smem:[#allocation0]]
  $region81: #{inverted_residual_forward.1} parent=0
    _
  %s15 = ssub.s32 1, %s13
  %s16 = scalar_select 0, %s15, %s13
  loop: start=0, step=1, limit=4
  $region2: #{inverted_residual_forward.1} parent=0 // loop_pre_header
    _
  $region3: #{inverted_residual_forward.1} parent=0 // loop_header
    %s18 = sphi 0, %s22
    %p19 = scmp.ge.s32.totalorder %s18, 4
    %s28 = sphi 0, %s30
    %s31 = sphi 0, %s28
    %s32 = sphi 0, %s31
    %s48 = sphi 0, %s32
    %s52 = sphi 0, %s52
    %s54 = sphi 0, %s52
    %s55 = sphi 0, %s54
    %s69 = sphi 0, %s55
    %s73 = sphi 0, %s73
    %s75 = sphi 0, %s73
    %s76 = sphi 0, %s75
    %s90 = sphi 0, %s76
    %s94 = sphi 0, %s94
    %s96 = sphi 0, %s94
    %s97 = sphi 0, %s96
    %s111 = sphi 0, %s97
    %s115 = sphi 0, %s115
    %s117 = sphi 0, %s115
    %s118 = sphi 0, %s117
    %s132 = sphi 0, %s118
    %s136 = sphi 0, %s136
    %s138 = sphi 0, %s136
    %s139 = sphi 0, %s138
    %s153 = sphi 0, %s139
    %s157 = sphi 0, %s157
    %s159 = sphi 0, %s157
    %s160 = sphi 0, %s159
    %s174 = sphi 0, %s160
    %s178 = sphi 0, %s178
    %s180 = sphi 0, %s178
    %s181 = sphi 0, %s180
    %s195 = sphi 0, %s181
    %s199 = sphi 0, %s199
    %s201 = sphi 0, %s199
    %s202 = sphi 0, %s201
    %s216 = sphi 0, %s202
    %s220 = sphi 0, %s220
    %s222 = sphi 0, %s220
    %s223 = sphi 0, %s222
    %s237 = sphi 0, %s223
    %s241 = sphi 0, %s241
    %s243 = sphi 0, %s241
    %s244 = sphi 0, %s243
    %s258 = sphi 0, %s244
    %s262 = sphi 0, %s262
    %s264 = sphi 0, %s262
    %s265 = sphi 0, %s264
    %s279 = sphi 0, %s265
    %s285 = sphi 0, %s287
    %s288 = sphi 0, %s285
    %s289 = sphi 0, %s288
    %s305 = sphi 0, %s289
  $region4: #{inverted_residual_forward.1} parent=0 // loop_header_branch
    %21 = sbr.rel (%p19) target = $region8
  $region5: #{inverted_residual_forward.1} parent=0 // loop_body
    %s23 = ssub.s32 %s18, 1
    %s24 = ssub.s32 %s18, 2
    %s25 = sadd.s32 %s18, 1
    %s26 = ssub.s32 %s18, %s25
    %p27 = scmp.eq.s32.totalorder %s26, 0
    %s29 = sadd.s32 %s28, 1
    %s30 = scalar_select %p27, %s28, %s29
    %p33 = pneg %p27
    %p34 = scmp.eq.s32.totalorder %s18, 1
    %p35 = por %p33, %p34
    %p36 = scmp.ne.s32.totalorder %s28, %s31
    %p37 = scmp.eq.s32.totalorder %s18, 0
    %p38 = por %p36, %p37
    %p39 = scmp.ne.s32.totalorder %s28, %s31
    %p40 = scmp.eq.s32.totalorder %s23, 1
    %p41 = por %p39, %p40
    %p42 = scmp.ne.s32.totalorder %s31, %s32
    %p43 = scmp.eq.s32.totalorder %s23, 0
    %p44 = por %p42, %p43
    %p45 = scmp.ne.s32.totalorder %s31, %s32
    %p46 = scmp.eq.s32.totalorder %s24, 1
    %p47 = por %p45, %p46
    %p49 = scmp.ne.s32.totalorder %s32, %s48
    %p50 = scmp.eq.s32.totalorder %s24, 0
    %p51 = por %p49, %p50
    %s53 = sadd.s32 %s52, 1
    %p56 = scmp.eq.s32.totalorder %s18, 1
    %p57 = scmp.ne.s32.totalorder %s52, %s54
    %p58 = scmp.eq.s32.totalorder %s18, 0
    %p59 = por %p57, %p58
    %p60 = scmp.ne.s32.totalorder %s52, %s54
    %p61 = scmp.eq.s32.totalorder %s23, 1
    %p62 = por %p60, %p61
    %p63 = scmp.ne.s32.totalorder %s54, %s55
    %p64 = scmp.eq.s32.totalorder %s23, 0
    %p65 = por %p63, %p64
    %p66 = scmp.ne.s32.totalorder %s54, %s55
    %p67 = scmp.eq.s32.totalorder %s24, 1
    %p68 = por %p66, %p67
    %p70 = scmp.ne.s32.totalorder %s55, %s69
    %p71 = scmp.eq.s32.totalorder %s24, 0
    %p72 = por %p70, %p71
    %s74 = sadd.s32 %s73, 1
    %p77 = scmp.eq.s32.totalorder %s18, 1
    %p78 = scmp.ne.s32.totalorder %s73, %s75
    %p79 = scmp.eq.s32.totalorder %s18, 0
    %p80 = por %p78, %p79
    %p81 = scmp.ne.s32.totalorder %s73, %s75
    %p82 = scmp.eq.s32.totalorder %s23, 1
    %p83 = por %p81, %p82
    %p84 = scmp.ne.s32.totalorder %s75, %s76
    %p85 = scmp.eq.s32.totalorder %s23, 0
    %p86 = por %p84, %p85
    %p87 = scmp.ne.s32.totalorder %s75, %s76
    %p88 = scmp.eq.s32.totalorder %s24, 1
    %p89 = por %p87, %p88
    %p91 = scmp.ne.s32.totalorder %s76, %s90
    %p92 = scmp.eq.s32.totalorder %s24, 0
    %p93 = por %p91, %p92
    %s95 = sadd.s32 %s94, 1
    %p98 = scmp.eq.s32.totalorder %s18, 1
    %p99 = scmp.ne.s32.totalorder %s94, %s96
    %p100 = scmp.eq.s32.totalorder %s18, 0
    %p101 = por %p99, %p100
    %p102 = scmp.ne.s32.totalorder %s94, %s96
    %p103 = scmp.eq.s32.totalorder %s23, 1
    %p104 = por %p102, %p103
    %p105 = scmp.ne.s32.totalorder %s96, %s97
    %p106 = scmp.eq.s32.totalorder %s23, 0
    %p107 = por %p105, %p106
    %p108 = scmp.ne.s32.totalorder %s96, %s97
    %p109 = scmp.eq.s32.totalorder %s24, 1
    %p110 = por %p108, %p109
    %p112 = scmp.ne.s32.totalorder %s97, %s111
    %p113 = scmp.eq.s32.totalorder %s24, 0
    %p114 = por %p112, %p113
    %s116 = sadd.s32 %s115, 1
    %p119 = scmp.eq.s32.totalorder %s18, 1
    %p120 = scmp.ne.s32.totalorder %s115, %s117
    %p121 = scmp.eq.s32.totalorder %s18, 0
    %p122 = por %p120, %p121
    %p123 = scmp.ne.s32.totalorder %s115, %s117
    %p124 = scmp.eq.s32.totalorder %s23, 1
    %p125 = por %p123, %p124
    %p126 = scmp.ne.s32.totalorder %s117, %s118
    %p127 = scmp.eq.s32.totalorder %s23, 0
    %p128 = por %p126, %p127
    %p129 = scmp.ne.s32.totalorder %s117, %s118
    %p130 = scmp.eq.s32.totalorder %s24, 1
    %p131 = por %p129, %p130
    %p133 = scmp.ne.s32.totalorder %s118, %s132
    %p134 = scmp.eq.s32.totalorder %s24, 0
    %p135 = por %p133, %p134
    %s137 = sadd.s32 %s136, 1
    %p140 = scmp.eq.s32.totalorder %s18, 1
    %p141 = scmp.ne.s32.totalorder %s136, %s138
    %p142 = scmp.eq.s32.totalorder %s18, 0
    %p143 = por %p141, %p142
    %p144 = scmp.ne.s32.totalorder %s136, %s138
    %p145 = scmp.eq.s32.totalorder %s23, 1
    %p146 = por %p144, %p145
    %p147 = scmp.ne.s32.totalorder %s138, %s139
    %p148 = scmp.eq.s32.totalorder %s23, 0
    %p149 = por %p147, %p148
    %p150 = scmp.ne.s32.totalorder %s138, %s139
    %p151 = scmp.eq.s32.totalorder %s24, 1
    %p152 = por %p150, %p151
    %p154 = scmp.ne.s32.totalorder %s139, %s153
    %p155 = scmp.eq.s32.totalorder %s24, 0
    %p156 = por %p154, %p155
    %s158 = sadd.s32 %s157, 1
    %p161 = scmp.eq.s32.totalorder %s18, 1
    %p162 = scmp.ne.s32.totalorder %s157, %s159
    %p163 = scmp.eq.s32.totalorder %s18, 0
    %p164 = por %p162, %p163
    %p165 = scmp.ne.s32.totalorder %s157, %s159
    %p166 = scmp.eq.s32.totalorder %s23, 1
    %p167 = por %p165, %p166
    %p168 = scmp.ne.s32.totalorder %s159, %s160
    %p169 = scmp.eq.s32.totalorder %s23, 0
    %p170 = por %p168, %p169
    %p171 = scmp.ne.s32.totalorder %s159, %s160
    %p172 = scmp.eq.s32.totalorder %s24, 1
    %p173 = por %p171, %p172
    %p175 = scmp.ne.s32.totalorder %s160, %s174
    %p176 = scmp.eq.s32.totalorder %s24, 0
    %p177 = por %p175, %p176
    %s179 = sadd.s32 %s178, 1
    %p182 = scmp.eq.s32.totalorder %s18, 1
    %p183 = scmp.ne.s32.totalorder %s178, %s180
    %p184 = scmp.eq.s32.totalorder %s18, 0
    %p185 = por %p183, %p184
    %p186 = scmp.ne.s32.totalorder %s178, %s180
    %p187 = scmp.eq.s32.totalorder %s23, 1
    %p188 = por %p186, %p187
    %p189 = scmp.ne.s32.totalorder %s180, %s181
    %p190 = scmp.eq.s32.totalorder %s23, 0
    %p191 = por %p189, %p190
    %p192 = scmp.ne.s32.totalorder %s180, %s181
    %p193 = scmp.eq.s32.totalorder %s24, 1
    %p194 = por %p192, %p193
    %p196 = scmp.ne.s32.totalorder %s181, %s195
    %p197 = scmp.eq.s32.totalorder %s24, 0
    %p198 = por %p196, %p197
    %s200 = sadd.s32 %s199, 1
    %p203 = scmp.eq.s32.totalorder %s18, 1
    %p204 = scmp.ne.s32.totalorder %s199, %s201
    %p205 = scmp.eq.s32.totalorder %s18, 0
    %p206 = por %p204, %p205
    %p207 = scmp.ne.s32.totalorder %s199, %s201
    %p208 = scmp.eq.s32.totalorder %s23, 1
    %p209 = por %p207, %p208
    %p210 = scmp.ne.s32.totalorder %s201, %s202
    %p211 = scmp.eq.s32.totalorder %s23, 0
    %p212 = por %p210, %p211
    %p213 = scmp.ne.s32.totalorder %s201, %s202
    %p214 = scmp.eq.s32.totalorder %s24, 1
    %p215 = por %p213, %p214
    %p217 = scmp.ne.s32.totalorder %s202, %s216
    %p218 = scmp.eq.s32.totalorder %s24, 0
    %p219 = por %p217, %p218
    %s221 = sadd.s32 %s220, 1
    %p224 = scmp.eq.s32.totalorder %s18, 1
    %p225 = scmp.ne.s32.totalorder %s220, %s222
    %p226 = scmp.eq.s32.totalorder %s18, 0
    %p227 = por %p225, %p226
    %p228 = scmp.ne.s32.totalorder %s220, %s222
    %p229 = scmp.eq.s32.totalorder %s23, 1
    %p230 = por %p228, %p229
    %p231 = scmp.ne.s32.totalorder %s222, %s223
    %p232 = scmp.eq.s32.totalorder %s23, 0
    %p233 = por %p231, %p232
    %p234 = scmp.ne.s32.totalorder %s222, %s223
    %p235 = scmp.eq.s32.totalorder %s24, 1
    %p236 = por %p234, %p235
    %p238 = scmp.ne.s32.totalorder %s223, %s237
    %p239 = scmp.eq.s32.totalorder %s24, 0
    %p240 = por %p238, %p239
    %s242 = sadd.s32 %s241, 1
    %p245 = scmp.eq.s32.totalorder %s18, 1
    %p246 = scmp.ne.s32.totalorder %s241, %s243
    %p247 = scmp.eq.s32.totalorder %s18, 0
    %p248 = por %p246, %p247
    %p249 = scmp.ne.s32.totalorder %s241, %s243
    %p250 = scmp.eq.s32.totalorder %s23, 1
    %p251 = por %p249, %p250
    %p252 = scmp.ne.s32.totalorder %s243, %s244
    %p253 = scmp.eq.s32.totalorder %s23, 0
    %p254 = por %p252, %p253
    %p255 = scmp.ne.s32.totalorder %s243, %s244
    %p256 = scmp.eq.s32.totalorder %s24, 1
    %p257 = por %p255, %p256
    %p259 = scmp.ne.s32.totalorder %s244, %s258
    %p260 = scmp.eq.s32.totalorder %s24, 0
    %p261 = por %p259, %p260
    %s263 = sadd.s32 %s262, 1
    %p266 = scmp.eq.s32.totalorder %s18, 1
    %p267 = scmp.ne.s32.totalorder %s262, %s264
    %p268 = scmp.eq.s32.totalorder %s18, 0
    %p269 = por %p267, %p268
    %p270 = scmp.ne.s32.totalorder %s262, %s264
    %p271 = scmp.eq.s32.totalorder %s23, 1
    %p272 = por %p270, %p271
    %p273 = scmp.ne.s32.totalorder %s264, %s265
    %p274 = scmp.eq.s32.totalorder %s23, 0
    %p275 = por %p273, %p274
    %p276 = scmp.ne.s32.totalorder %s264, %s265
    %p277 = scmp.eq.s32.totalorder %s24, 1
    %p278 = por %p276, %p277
    %p280 = scmp.ne.s32.totalorder %s265, %s279
    %p281 = scmp.eq.s32.totalorder %s24, 0
    %p282 = por %p280, %p281
    %s283 = ssub.s32 %s18, %s25
    %p284 = scmp.eq.s32.totalorder %s283, 0
    %s286 = sadd.s32 %s285, 1
    %s287 = scalar_select %p284, %s285, %s286
    %p290 = pneg %p284
    %p291 = scmp.eq.s32.totalorder %s18, 1
    %p292 = por %p290, %p291
    %p293 = scmp.ne.s32.totalorder %s285, %s288
    %p294 = scmp.eq.s32.totalorder %s18, 0
    %p295 = por %p293, %p294
    %p296 = scmp.ne.s32.totalorder %s285, %s288
    %p297 = scmp.eq.s32.totalorder %s23, 1
    %p298 = por %p296, %p297
    %p299 = scmp.ne.s32.totalorder %s288, %s289
    %p300 = scmp.eq.s32.totalorder %s23, 0
    %p301 = por %p299, %p300
    %p302 = scmp.ne.s32.totalorder %s288, %s289
    %p303 = scmp.eq.s32.totalorder %s24, 1
    %p304 = por %p302, %p303
    %p306 = scmp.ne.s32.totalorder %s289, %s305
    %p307 = scmp.eq.s32.totalorder %s24, 0
    %p308 = por %p306, %p307
    %p309 = scmp.le.s32.totalorder 1, %s18
    %p310 = scmp.lt.s32.totalorder %s18, 3
    %p311 = pnand %p309, %p310
    %p312 = pneg %p311
    // Predicated region
    $region9: #{inverted_residual_forward.1} parent=5 // pred_check
      _
    $region10: #{inverted_residual_forward.1} parent=5 // pred_check_branch
      %314 = sbr.rel (%p311) target = $region12
    $region11: #{inverted_residual_forward.1} parent=5 // pred_region
      %s315 = ssub.s32 %s18, 1
      // Predicated region
      $region13: #{inverted_residual_forward.1} parent=11 // pred_check
        %p316 = pneg %p65
      $region14: #{inverted_residual_forward.1} parent=11 // pred_check_branch
        %318 = sbr.rel (%p316) target = $region16
      $region15: #{inverted_residual_forward.1} parent=11 // pred_region
        _
      $region16: #{inverted_residual_forward.1} parent=11 // pred_fallthru
        _
      // Predicated region
      $region17: #{inverted_residual_forward.1} parent=11 // pred_check
        %p319 = pneg %p86
      $region18: #{inverted_residual_forward.1} parent=11 // pred_check_branch
        %321 = sbr.rel (%p319) target = $region20
      $region19: #{inverted_residual_forward.1} parent=11 // pred_region
        _
      $region20: #{inverted_residual_forward.1} parent=11 // pred_fallthru
        _
      // Predicated region
      $region21: #{inverted_residual_forward.1} parent=11 // pred_check
        %p322 = pneg %p107
      $region22: #{inverted_residual_forward.1} parent=11 // pred_check_branch
        %324 = sbr.rel (%p322) target = $region24
      $region23: #{inverted_residual_forward.1} parent=11 // pred_region
        _
      $region24: #{inverted_residual_forward.1} parent=11 // pred_fallthru
        _
      // Predicated region
      $region25: #{inverted_residual_forward.1} parent=11 // pred_check
        %p325 = pneg %p128
      $region26: #{inverted_residual_forward.1} parent=11 // pred_check_branch
        %327 = sbr.rel (%p325) target = $region28
      $region27: #{inverted_residual_forward.1} parent=11 // pred_region
        _
      $region28: #{inverted_residual_forward.1} parent=11 // pred_fallthru
        _
      // Predicated region
      $region29: #{inverted_residual_forward.1} parent=11 // pred_check
        %p328 = pneg %p149
      $region30: #{inverted_residual_forward.1} parent=11 // pred_check_branch
        %330 = sbr.rel (%p328) target = $region32
      $region31: #{inverted_residual_forward.1} parent=11 // pred_region
        _
      $region32: #{inverted_residual_forward.1} parent=11 // pred_fallthru
        _
      // Predicated region
      $region33: #{inverted_residual_forward.1} parent=11 // pred_check
        %p331 = pneg %p170
      $region34: #{inverted_residual_forward.1} parent=11 // pred_check_branch
        %333 = sbr.rel (%p331) target = $region36
      $region35: #{inverted_residual_forward.1} parent=11 // pred_region
        _
      $region36: #{inverted_residual_forward.1} parent=11 // pred_fallthru
        _
      // Predicated region
      $region37: #{inverted_residual_forward.1} parent=11 // pred_check
        %p334 = pneg %p191
      $region38: #{inverted_residual_forward.1} parent=11 // pred_check_branch
        %336 = sbr.rel (%p334) target = $region40
      $region39: #{inverted_residual_forward.1} parent=11 // pred_region
        _
      $region40: #{inverted_residual_forward.1} parent=11 // pred_fallthru
        _
      // Predicated region
      $region41: #{inverted_residual_forward.1} parent=11 // pred_check
        %p337 = pneg %p212
      $region42: #{inverted_residual_forward.1} parent=11 // pred_check_branch
        %339 = sbr.rel (%p337) target = $region44
      $region43: #{inverted_residual_forward.1} parent=11 // pred_region
        _
      $region44: #{inverted_residual_forward.1} parent=11 // pred_fallthru
        _
      // Predicated region
      $region45: #{inverted_residual_forward.1} parent=11 // pred_check
        %p340 = pneg %p233
      $region46: #{inverted_residual_forward.1} parent=11 // pred_check_branch
        %342 = sbr.rel (%p340) target = $region48
      $region47: #{inverted_residual_forward.1} parent=11 // pred_region
        _
      $region48: #{inverted_residual_forward.1} parent=11 // pred_fallthru
        _
      // Predicated region
      $region49: #{inverted_residual_forward.1} parent=11 // pred_check
        %p343 = pneg %p254
      $region50: #{inverted_residual_forward.1} parent=11 // pred_check_branch
        %345 = sbr.rel (%p343) target = $region52
      $region51: #{inverted_residual_forward.1} parent=11 // pred_region
        _
      $region52: #{inverted_residual_forward.1} parent=11 // pred_fallthru
        _
      // Predicated region
      $region53: #{inverted_residual_forward.1} parent=11 // pred_check
        %p346 = pneg %p275
      $region54: #{inverted_residual_forward.1} parent=11 // pred_check_branch
        %348 = sbr.rel (%p346) target = $region56
      $region55: #{inverted_residual_forward.1} parent=11 // pred_region
        _
      $region56: #{inverted_residual_forward.1} parent=11 // pred_fallthru
        _
    $region12: #{inverted_residual_forward.1} parent=5 // pred_fallthru
      _
    %p349 = scmp.lt.s32.totalorder %s18, 2
    // Predicated region
    $region57: #{inverted_residual_forward.1} parent=5 // pred_check
      %p350 = pneg %p349
    $region58: #{inverted_residual_forward.1} parent=5 // pred_check_branch
      %352 = sbr.rel (%p350) target = $region60
    $region59: #{inverted_residual_forward.1} parent=5 // pred_region
      // Predicated region
      $region61: #{inverted_residual_forward.1} parent=59 // pred_check
        %p353 = pneg %p38
      $region62: #{inverted_residual_forward.1} parent=59 // pred_check_branch
        %355 = sbr.rel (%p353) target = $region64
      $region63: #{inverted_residual_forward.1} parent=59 // pred_region
        %p356 = scmp.lt.s32.totalorder %s18, 1
        %s357 = scalar_select %p356, %s18, 1
        %s358 = smul.addr %s357, 4
        %s359 = smul.addr %s358, 8
        %s360 = scalar_lea.vmem %s0, %s359
      $region64: #{inverted_residual_forward.1} parent=59 // pred_fallthru
        _
    $region60: #{inverted_residual_forward.1} parent=5 // pred_fallthru
      _
    %p361 = scmp.le.s32.totalorder 1, %s18
    %p362 = scmp.lt.s32.totalorder %s18, 3
    %p363 = pnand %p361, %p362
    %p364 = pneg %p363
    // Predicated region
    $region65: #{inverted_residual_forward.1} parent=5 // pred_check
      _
    $region66: #{inverted_residual_forward.1} parent=5 // pred_check_branch
      %366 = sbr.rel (%p363) target = $region68
    $region67: #{inverted_residual_forward.1} parent=5 // pred_region
      %s367 = ssub.s32 %s18, 1
      %p368 = scmp.lt.s32.totalorder %s23, 1
      %s369 = scalar_select %p368, %s23, 1
      %s370 = smul.addr %s369, 4
      %s371 = smul.addr %s370, 8
      %s372 = scalar_lea.vmem %s0, %s371
      %p373 = pneg %p44
      %p374 = pneg %p41
      %p375 = pneg %p65
      %p376 = pneg %p62
      %p377 = pneg %p86
      %p378 = pneg %p83
      %p379 = pneg %p107
      %p380 = pneg %p104
      %p381 = pneg %p128
      %p382 = pneg %p125
      %p383 = pneg %p149
      %p384 = pneg %p146
      %p385 = pneg %p170
      %p386 = pneg %p167
      %p387 = pneg %p191
      %p388 = pneg %p188
      %p389 = pneg %p212
      %p390 = pneg %p209
      %p391 = pneg %p233
      %p392 = pneg %p230
      %p393 = pneg %p254
      %p394 = pneg %p251
      %p395 = pneg %p275
      %p396 = pneg %p272
      %p397 = pneg %p301
      %p398 = pneg %p298
      %p399 = scmp.lt.s32.totalorder %s23, 1
      %s400 = scalar_select %p399, %s23, 1
      %s401 = smul.addr %s400, 4
      %s402 = smul.addr %s401, 8
      %s403 = scalar_lea.vmem %s12, %s402
      %p404 = scmp.lt.s32.totalorder %s23, 1
      %s405 = scalar_select %p404, %s23, 1
      %s406 = smul.addr %s405, 4
      %s407 = smul.addr %s406, 8
      %s408 = scalar_lea.vmem %s0, %s407
      %p409 = scmp.lt.s32.totalorder %s23, 1
      %s410 = scalar_select %p409, %s23, 1
      %s411 = smul.addr %s410, 4
      %s412 = smul.addr %s411, 8
      %s413 = scalar_lea.vmem %s12, %s412
      %v414 = vld [vmem:[%s408] sm:$0xff]
      %v415 = vld [vmem:[%s408 + $0x8] sm:$0xff]
      %v416 = vld [vmem:[%s408 + $0x10] sm:$0xff]
      %v417 = vld [vmem:[%s408 + $0x18] sm:$0xff]
      %v418 = vld [vmem:[%s1] sm:$0xff]
      %v419 = vld [vmem:[%s1 + $0x8] sm:$0xff]
      %v420 = vld [vmem:[%s1 + $0x10] sm:$0xff]
      %v421 = vld [vmem:[%s1 + $0x18] sm:$0xff]
      %v422 = vld [vmem:[%s1 + $0x20] sm:$0xff]
      %v423 = vld [vmem:[%s1 + $0x28] sm:$0xff]
      %v424 = vld [vmem:[%s1 + $0x30] sm:$0xff]
      %v425 = vld [vmem:[%s1 + $0x38] sm:$0xff]
      %v426 = vld [vmem:[%s2] sm:$0xff]
      %v427 = vld [vmem:[%s2 + $0x8] sm:$0xff]
      %v428 = vld [vmem:[%s2 + $0x10] sm:$0xff]
      %v429 = vld [vmem:[%s2 + $0x18] sm:$0xff]
      %v430 = vld [vmem:[%s2 + $0x20] sm:$0xff]
      %v431 = vld [vmem:[%s2 + $0x28] sm:$0xff]
      %v432 = vld [vmem:[%s2 + $0x30] sm:$0xff]
      %v433 = vld [vmem:[%s2 + $0x38] sm:$0xff]
      %435 = vset.pattern.permute.xlu0 0
      %436 = vperm.xlu0 %435, %v426
      %v437 = vpop.permute.xlu0 %436
      %440 = vset.pattern.permute.xlu0 0
      %441 = vperm.xlu0 %440, %v427
      %v442 = vpop.permute.xlu0 %441
      %445 = vset.pattern.permute.xlu0 0
      %446 = vperm.xlu0 %445, %v428
      %v447 = vpop.permute.xlu0 %446
      %450 = vset.pattern.permute.xlu0 0
      %451 = vperm.xlu0 %450, %v429
      %v452 = vpop.permute.xlu0 %451
      %455 = vset.pattern.permute.xlu0 0
      %456 = vperm.xlu0 %455, %v430
      %v457 = vpop.permute.xlu0 %456
      %460 = vset.pattern.permute.xlu0 0
      %461 = vperm.xlu0 %460, %v431
      %v462 = vpop.permute.xlu0 %461
      %465 = vset.pattern.permute.xlu0 0
      %466 = vperm.xlu0 %465, %v432
      %v467 = vpop.permute.xlu0 %466
      %470 = vset.pattern.permute.xlu0 0
      %471 = vperm.xlu0 %470, %v433
      %v472 = vpop.permute.xlu0 %471
      %vm474 = vcmask 130048
      %v476 = vsel %vm474, %v418, 0
      %v479 = vsel %vm474, %v419, 0
      %v482 = vsel %vm474, %v420, 0
      %v485 = vsel %vm474, %v421, 0
      %v488 = vsel %vm474, %v422, 0
      %v491 = vsel %vm474, %v423, 0
      %v494 = vsel %vm474, %v424, 0
      %v497 = vsel %vm474, %v425, 0
      %499 = vmatprep.subr.mxu0 %v415
      %500 = vmatpush1.msra.mxu0 %v414
      %501 = vmatprep.subr.mxu0 %v417
      %502 = vmatpush1.msra.mxu0 %v416
      %503 = vmatprep.subr.mxu0 0.0
      %504 = vmatpush1.msra.mxu0 0.0
      %505 = vmatprep.subr.mxu0 0.0
      %506 = vmatpush1.msra.mxu0 0.0
      %507 = vmatprep.subr.mxu0 0.0
      %508 = vmatpush1.msra.mxu0 0.0
      %509 = vmatprep.subr.mxu0 0.0
      %510 = vmatpush1.msra.mxu0 0.0
      %511 = vmatprep.subr.mxu0 0.0
      %512 = vmatpush1.msra.mxu0 0.0
      %513 = vmatprep.subr.mxu0 0.0
      %514 = vmatpush1.msra.mxu0 0.0
      %515 = vmatprep.subr.mxu0 0.0
      %516 = vmatpush1.msra.mxu0 0.0
      %517 = vmatprep.subr.mxu0 0.0
      %518 = vmatpush1.msra.mxu0 0.0
      %519 = vmatprep.subr.mxu0 0.0
      %520 = vmatpush1.msra.mxu0 0.0
      %521 = vmatprep.subr.mxu0 0.0
      %522 = vmatpush1.msra.mxu0 0.0
      %523 = vmatprep.subr.mxu0 0.0
      %524 = vmatpush1.msra.mxu0 0.0
      %525 = vmatprep.subr.mxu0 0.0
      %526 = vmatpush1.msra.mxu0 0.0
      %527 = vmatprep.subr.mxu0 0.0
      %528 = vmatpush1.msra.mxu0 0.0
      %529 = vmatprep.subr.mxu0 0.0
      %530 = vmatpush1.msra.mxu0 0.0
      %531 = vmatprep.subr.mxu0 0.0
      %532 = vmatpush1.msra.mxu0 0.0
      %533 = vmatprep.subr.mxu0 0.0
      %534 = vmatpush1.msra.mxu0 0.0
      %535 = vmatprep.subr.mxu0 0.0
      %536 = vmatpush1.msra.mxu0 0.0
      %537 = vmatprep.subr.mxu0 0.0
      %538 = vmatpush1.msra.mxu0 0.0
      %539 = vmatprep.subr.mxu0 0.0
      %540 = vmatpush1.msra.mxu0 0.0
      %541 = vmatprep.subr.mxu0 0.0
      %542 = vmatpush1.msra.mxu0 0.0
      %543 = vmatprep.subr.mxu0 0.0
      %544 = vmatpush1.msra.mxu0 0.0
      %545 = vmatprep.subr.mxu0 0.0
      %546 = vmatpush1.msra.mxu0 0.0
      %547 = vmatprep.subr.mxu0 0.0
      %548 = vmatpush1.msra.mxu0 0.0
      %549 = vmatprep.subr.mxu0 0.0
      %550 = vmatpush1.msra.mxu0 0.0
      %551 = vmatprep.subr.mxu0 0.0
      %552 = vmatpush1.msra.mxu0 0.0
      %553 = vmatprep.subr.mxu0 0.0
      %554 = vmatpush1.msra.mxu0 0.0
      %555 = vmatprep.subr.mxu0 0.0
      %556 = vmatpush1.msra.mxu0 0.0
      %557 = vmatprep.subr.mxu0 0.0
      %558 = vmatpush1.msra.mxu0 0.0
      %559 = vmatprep.subr.mxu0 0.0
      %560 = vmatpush1.msra.mxu0 0.0
      %561 = vmatprep.subr.mxu0 0.0
      %562 = vmatpush1.msra.mxu0 0.0
      %563 = vmatprep.mubr.f32.mxu0 0.0
      %564 = vmatmul.mubr.f32.gmra.mrb[0].mxu0 %v476
      %v565 = vpop.f32.mrb[0].mxu0
      %v566 = vadd.f32 %v437, %v565
      %v567 = vpop.f32.mrb[0].mxu0
      %v568 = vadd.f32 %v437, %v567
      %569 = vmatprep.mubr.f32.mxu0 0.0
      %570 = vmatmul.mubr.f32.gmra.mrb[0].mxu0 %v479
      %v571 = vpop.f32.mrb[0].mxu0
      %v572 = vadd.f32 %v442, %v571
      %v573 = vpop.f32.mrb[0].mxu0
      %v574 = vadd.f32 %v442, %v573
      %575 = vmatprep.mubr.f32.mxu0 0.0
      %576 = vmatmul.mubr.f32.gmra.mrb[0].mxu0 %v482
      %v577 = vpop.f32.mrb[0].mxu0
      %v578 = vadd.f32 %v447, %v577
      %v579 = vpop.f32.mrb[0].mxu0
      %v580 = vadd.f32 %v447, %v579
      %581 = vmatprep.mubr.f32.mxu0 0.0
      %582 = vmatmul.mubr.f32.gmra.mrb[0].mxu0 %v485
      %v583 = vpop.f32.mrb[0].mxu0
      %v584 = vadd.f32 %v452, %v583
      %v585 = vpop.f32.mrb[0].mxu0
      %v586 = vadd.f32 %v452, %v585
      %587 = vmatprep.mubr.f32.mxu0 0.0
      %588 = vmatmul.mubr.f32.gmra.mrb[0].mxu0 %v488
      %v589 = vpop.f32.mrb[0].mxu0
      %v590 = vadd.f32 %v457, %v589
      %v591 = vpop.f32.mrb[0].mxu0
      %v592 = vadd.f32 %v457, %v591
      %593 = vmatprep.mubr.f32.mxu0 0.0
      %594 = vmatmul.mubr.f32.gmra.mrb[0].mxu0 %v491
      %v595 = vpop.f32.mrb[0].mxu0
      %v596 = vadd.f32 %v462, %v595
      %v597 = vpop.f32.mrb[0].mxu0
      %v598 = vadd.f32 %v462, %v597
      %599 = vmatprep.mubr.f32.mxu0 0.0
      %600 = vmatmul.mubr.f32.gmra.mrb[0].mxu0 %v494
      %v601 = vpop.f32.mrb[0].mxu0
      %v602 = vadd.f32 %v467, %v601
      %v603 = vpop.f32.mrb[0].mxu0
      %v604 = vadd.f32 %v467, %v603
      %605 = vmatprep.mubr.f32.mxu0 0.0
      %606 = vmatmul.mubr.f32.gmra.mrb[0].mxu0 %v497
      %v607 = vpop.f32.mrb[0].mxu0
      %v608 = vadd.f32 %v472, %v607
      %v609 = vpop.f32.mrb[0].mxu0
      %v610 = vadd.f32 %v472, %v609
      %611 = vdwg.mxu0
      %v612 = vadd.f32 %v566, 3.0
      %v613 = vadd.f32 %v568, 3.0
      %v614 = vadd.f32 %v572, 3.0
      %v615 = vadd.f32 %v574, 3.0
      %v616 = vadd.f32 %v578, 3.0
      %v617 = vadd.f32 %v580, 3.0
      %v618 = vadd.f32 %v584, 3.0
      %v619 = vadd.f32 %v586, 3.0
      %v620 = vadd.f32 %v590, 3.0
      %v621 = vadd.f32 %v592, 3.0
      %v622 = vadd.f32 %v596, 3.0
      %v623 = vadd.f32 %v598, 3.0
      %v624 = vadd.f32 %v602, 3.0
      %v625 = vadd.f32 %v604, 3.0
      %v626 = vadd.f32 %v608, 3.0
      %v627 = vadd.f32 %v610, 3.0
      %v628 = vmax.f32 %v612, 0.0
      %v629 = vmax.f32 %v613, 0.0
      %v630 = vmax.f32 %v614, 0.0
      %v631 = vmax.f32 %v615, 0.0
      %v632 = vmax.f32 %v616, 0.0
      %v633 = vmax.f32 %v617, 0.0
      %v634 = vmax.f32 %v618, 0.0
      %v635 = vmax.f32 %v619, 0.0
      %v636 = vmax.f32 %v620, 0.0
      %v637 = vmax.f32 %v621, 0.0
      %v638 = vmax.f32 %v622, 0.0
      %v639 = vmax.f32 %v623, 0.0
      %v640 = vmax.f32 %v624, 0.0
      %v641 = vmax.f32 %v625, 0.0
      %v642 = vmax.f32 %v626, 0.0
      %v643 = vmax.f32 %v627, 0.0
      %v644 = vmin.f32 %v628, 6.0
      %v645 = vmin.f32 %v629, 6.0
      %v646 = vmin.f32 %v630, 6.0
      %v647 = vmin.f32 %v631, 6.0
      %v648 = vmin.f32 %v632, 6.0
      %v649 = vmin.f32 %v633, 6.0
      %v650 = vmin.f32 %v634, 6.0
      %v651 = vmin.f32 %v635, 6.0
      %v652 = vmin.f32 %v636, 6.0
      %v653 = vmin.f32 %v637, 6.0
      %v654 = vmin.f32 %v638, 6.0
      %v655 = vmin.f32 %v639, 6.0
      %v656 = vmin.f32 %v640, 6.0
      %v657 = vmin.f32 %v641, 6.0
      %v658 = vmin.f32 %v642, 6.0
      %v659 = vmin.f32 %v643, 6.0
      %v660 = vmul.f32 %v566, %v644
      %v661 = vmul.f32 %v568, %v645
      %v662 = vmul.f32 %v572, %v646
      %v663 = vmul.f32 %v574, %v647
      %v664 = vmul.f32 %v578, %v648
      %v665 = vmul.f32 %v580, %v649
      %v666 = vmul.f32 %v584, %v650
      %v667 = vmul.f32 %v586, %v651
      %v668 = vmul.f32 %v590, %v652
      %v669 = vmul.f32 %v592, %v653
      %v670 = vmul.f32 %v596, %v654
      %v671 = vmul.f32 %v598, %v655
      %v672 = vmul.f32 %v602, %v656
      %v673 = vmul.f32 %v604, %v657
      %v674 = vmul.f32 %v608, %v658
      %v675 = vmul.f32 %v610, %v659
      %v676 = vmul.f32 %v660, 0.16666667
      %v677 = vmul.f32 %v661, 0.16666667
      %v678 = vmul.f32 %v662, 0.16666667
      %v679 = vmul.f32 %v663, 0.16666667
      %v680 = vmul.f32 %v664, 0.16666667
      %v681 = vmul.f32 %v665, 0.16666667
      %v682 = vmul.f32 %v666, 0.16666667
      %v683 = vmul.f32 %v667, 0.16666667
      %v684 = vmul.f32 %v668, 0.16666667
      %v685 = vmul.f32 %v669, 0.16666667
      %v686 = vmul.f32 %v670, 0.16666667
      %v687 = vmul.f32 %v671, 0.16666667
      %v688 = vmul.f32 %v672, 0.16666667
      %v689 = vmul.f32 %v673, 0.16666667
      %v690 = vmul.f32 %v674, 0.16666667
      %v691 = vmul.f32 %v675, 0.16666667
      %v692 = vld [vmem:[%s3] sm:$0xff]
      %v693 = vld [vmem:[%s3 + $0x8] sm:$0xff]
      %v694 = vld [vmem:[%s3 + $0x10] sm:$0xff]
      %v695 = vld [vmem:[%s3 + $0x18] sm:$0xff]
      %v696 = vld [vmem:[%s3 + $0x20] sm:$0xff]
      %v697 = vld [vmem:[%s3 + $0x28] sm:$0xff]
      %v698 = vld [vmem:[%s3 + $0x30] sm:$0xff]
      %v699 = vld [vmem:[%s3 + $0x38] sm:$0xff]
      %v700 = vld [vmem:[%s5] sm:$0xff]
      %v701 = vld [vmem:[%s5 + $0x8] sm:$0xff]
      %v702 = vld [vmem:[%s5 + $0x10] sm:$0x1]
      %v703 = vld [vmem:[%s5 + $0x18] sm:$0x1]
      %712 = vrot.lane.b32.xlu0 %v677, 17
      %v713 = vpop.permute.xlu0 %712
      %714 = vrot.lane.b32.xlu0 %v679, 17
      %v715 = vpop.permute.xlu0 %714
      %716 = vrot.lane.b32.xlu0 %v681, 17
      %v717 = vpop.permute.xlu0 %716
      %718 = vrot.lane.b32.xlu0 %v683, 17
      %v719 = vpop.permute.xlu0 %718
      %720 = vrot.lane.b32.xlu0 %v685, 17
      %v721 = vpop.permute.xlu0 %720
      %722 = vrot.lane.b32.xlu0 %v687, 17
      %v723 = vpop.permute.xlu0 %722
      %724 = vrot.lane.b32.xlu0 %v689, 17
      %v725 = vpop.permute.xlu0 %724
      %726 = vrot.lane.b32.xlu0 %v691, 17
      %v727 = vpop.permute.xlu0 %726
      %744 = vrot.lane.b32.xlu0 %v676, 17
      %v745 = vpop.permute.xlu0 %744
      %746 = vrot.lane.b32.xlu0 %v678, 17
      %v747 = vpop.permute.xlu0 %746
      %748 = vrot.lane.b32.xlu0 %v680, 17
      %v749 = vpop.permute.xlu0 %748
      %750 = vrot.lane.b32.xlu0 %v682, 17
      %v751 = vpop.permute.xlu0 %750
      %752 = vrot.lane.b32.xlu0 %v684, 17
      %v753 = vpop.permute.xlu0 %752
      %754 = vrot.lane.b32.xlu0 %v686, 17
      %v755 = vpop.permute.xlu0 %754
      %756 = vrot.lane.b32.xlu0 %v688, 17
      %v757 = vpop.permute.xlu0 %756
      %758 = vrot.lane.b32.xlu0 %v690, 17
      %v759 = vpop.permute.xlu0 %758
      %vm760 = vcmask 138240
      %v761 = vsel %vm760, %v745, %v713
      %v762 = vsel %vm760, %v747, %v715
      %v763 = vsel %vm760, %v749, %v717
      %v764 = vsel %vm760, %v751, %v719
      %v765 = vsel %vm760, %v753, %v721
      %v766 = vsel %vm760, %v755, %v723
      %v767 = vsel %vm760, %v757, %v725
      %v768 = vsel %vm760, %v759, %v727
      %v785 = vsel %vm760, %v713, %v745
      %v786 = vsel %vm760, %v715, %v747
      %v787 = vsel %vm760, %v717, %v749
      %v788 = vsel %vm760, %v719, %v751
      %v789 = vsel %vm760, %v721, %v753
      %v790 = vsel %vm760, %v723, %v755
      %v791 = vsel %vm760, %v725, %v757
      %v792 = vsel %vm760, %v727, %v759
      %794 = vset.pattern.permute.xlu0 0
      %795 = vperm.xlu0 %794, %v692
      %v796 = vpop.permute.xlu0 %795
      %799 = vset.pattern.permute.xlu0 0
      %800 = vperm.xlu0 %799, %v693
      %v801 = vpop.permute.xlu0 %800
      %804 = vset.pattern.permute.xlu0 0
      %805 = vperm.xlu0 %804, %v694
      %v806 = vpop.permute.xlu0 %805
      %809 = vset.pattern.permute.xlu0 0
      %810 = vperm.xlu0 %809, %v695
      %v811 = vpop.permute.xlu0 %810
      %814 = vset.pattern.permute.xlu0 0
      %815 = vperm.xlu0 %814, %v696
      %v816 = vpop.permute.xlu0 %815
      %819 = vset.pattern.permute.xlu0 0
      %820 = vperm.xlu0 %819, %v697
      %v821 = vpop.permute.xlu0 %820
      %824 = vset.pattern.permute.xlu0 0
      %825 = vperm.xlu0 %824, %v698
      %v826 = vpop.permute.xlu0 %825
      %829 = vset.pattern.permute.xlu0 0
      %830 = vperm.xlu0 %829, %v699
      %v831 = vpop.permute.xlu0 %830
      %v833 = vmul.f32 %v785, %v796
      %v834 = vmul.f32 %v761, %v796
      %v835 = vmul.f32 %v786, %v801
      %v836 = vmul.f32 %v762, %v801
      %v837 = vmul.f32 %v787, %v806
      %v838 = vmul.f32 %v763, %v806
      %v839 = vmul.f32 %v788, %v811
      %v840 = vmul.f32 %v764, %v811
      %v841 = vmul.f32 %v789, %v816
      %v842 = vmul.f32 %v765, %v816
      %v843 = vmul.f32 %v790, %v821
      %v844 = vmul.f32 %v766, %v821
      %v845 = vmul.f32 %v791, %v826
      %v846 = vmul.f32 %v767, %v826
      %v847 = vmul.f32 %v792, %v831
      %v848 = vmul.f32 %v768, %v831
      %v849 = vlaneseq
      %v850 = vshrl.u32 %v849, 7
      %v851 = vsub.s32 0, %v850
      %v852 = vrot.slane %v700, %v851
      %v853 = vlaneseq
      %v854 = vshrl.u32 %v853, 7
      %v855 = vsub.s32 0, %v854
      %v856 = vrot.slane %v701, %v855
      %v857 = vmul.f32 %v833, %v852
      %v858 = vmul.f32 %v834, %v856
      %v859 = vmul.f32 %v835, %v852
      %v860 = vmul.f32 %v836, %v856
      %v861 = vmul.f32 %v837, %v852
      %v862 = vmul.f32 %v838, %v856
      %v863 = vmul.f32 %v839, %v852
      %v864 = vmul.f32 %v840, %v856
      %v865 = vmul.f32 %v841, %v852
      %v866 = vmul.f32 %v842, %v856
      %v867 = vmul.f32 %v843, %v852
      %v868 = vmul.f32 %v844, %v856
      %v869 = vmul.f32 %v845, %v852
      %v870 = vmul.f32 %v846, %v856
      %v871 = vmul.f32 %v847, %v852
      %v872 = vmul.f32 %v848, %v856
      %v873 = vadd.f32 %v857, 0.0
      %v874 = vadd.f32 %v858, 0.0
      %v875 = vadd.f32 %v859, 0.0
      %v876 = vadd.f32 %v860, 0.0
      %v877 = vadd.f32 %v861, 0.0
      %v878 = vadd.f32 %v862, 0.0
      %v879 = vadd.f32 %v863, 0.0
      %v880 = vadd.f32 %v864, 0.0
      %v881 = vadd.f32 %v865, 0.0
      %v882 = vadd.f32 %v866, 0.0
      %v883 = vadd.f32 %v867, 0.0
      %v884 = vadd.f32 %v868, 0.0
      %v885 = vadd.f32 %v869, 0.0
      %v886 = vadd.f32 %v870, 0.0
      %v887 = vadd.f32 %v871, 0.0
      %v888 = vadd.f32 %v872, 0.0
      %889 = vrot.lane.b32.xlu0 %v677, 16
      %v890 = vpop.permute.xlu0 %889
      %891 = vrot.lane.b32.xlu0 %v679, 16
      %v892 = vpop.permute.xlu0 %891
      %893 = vrot.lane.b32.xlu0 %v681, 16
      %v894 = vpop.permute.xlu0 %893
      %895 = vrot.lane.b32.xlu0 %v683, 16
      %v896 = vpop.permute.xlu0 %895
      %897 = vrot.lane.b32.xlu0 %v685, 16
      %v898 = vpop.permute.xlu0 %897
      %899 = vrot.lane.b32.xlu0 %v687, 16
      %v900 = vpop.permute.xlu0 %899
      %901 = vrot.lane.b32.xlu0 %v689, 16
      %v902 = vpop.permute.xlu0 %901
      %903 = vrot.lane.b32.xlu0 %v691, 16
      %v904 = vpop.permute.xlu0 %903
      %913 = vrot.lane.b32.xlu0 %v676, 16
      %v914 = vpop.permute.xlu0 %913
      %915 = vrot.lane.b32.xlu0 %v678, 16
      %v916 = vpop.permute.xlu0 %915
      %917 = vrot.lane.b32.xlu0 %v680, 16
      %v918 = vpop.permute.xlu0 %917
      %919 = vrot.lane.b32.xlu0 %v682, 16
      %v920 = vpop.permute.xlu0 %919
      %921 = vrot.lane.b32.xlu0 %v684, 16
      %v922 = vpop.permute.xlu0 %921
      %923 = vrot.lane.b32.xlu0 %v686, 16
      %v924 = vpop.permute.xlu0 %923
      %925 = vrot.lane.b32.xlu0 %v688, 16
      %v926 = vpop.permute.xlu0 %925
      %927 = vrot.lane.b32.xlu0 %v690, 16
      %v928 = vpop.permute.xlu0 %927
      %v929 = vsel %vm474, %v914, %v890
      %v930 = vsel %vm474, %v916, %v892
      %v931 = vsel %vm474, %v918, %v894
      %v932 = vsel %vm474, %v920, %v896
      %v933 = vsel %vm474, %v922, %v898
      %v934 = vsel %vm474, %v924, %v900
      %v935 = vsel %vm474, %v926, %v902
      %v936 = vsel %vm474, %v928, %v904
      %v953 = vsel %vm474, %v890, %v914
      %v954 = vsel %vm474, %v892, %v916
      %v955 = vsel %vm474, %v894, %v918
      %v956 = vsel %vm474, %v896, %v920
      %v957 = vsel %vm474, %v898, %v922
      %v958 = vsel %vm474, %v900, %v924
      %v959 = vsel %vm474, %v902, %v926
      %v960 = vsel %vm474, %v904, %v928
      %961 = vset.pattern.permute.xlu0 1
      %962 = vperm.xlu0 %961, %v692
      %v963 = vpop.permute.xlu0 %962
      %965 = vset.pattern.permute.xlu0 1
      %966 = vperm.xlu0 %965, %v693
      %v967 = vpop.permute.xlu0 %966
      %969 = vset.pattern.permute.xlu0 1
      %970 = vperm.xlu0 %969, %v694
      %v971 = vpop.permute.xlu0 %970
      %973 = vset.pattern.permute.xlu0 1
      %974 = vperm.xlu0 %973, %v695
      %v975 = vpop.permute.xlu0 %974
      %977 = vset.pattern.permute.xlu0 1
      %978 = vperm.xlu0 %977, %v696
      %v979 = vpop.permute.xlu0 %978
      %981 = vset.pattern.permute.xlu0 1
      %982 = vperm.xlu0 %981, %v697
      %v983 = vpop.permute.xlu0 %982
      %985 = vset.pattern.permute.xlu0 1
      %986 = vperm.xlu0 %985, %v698
      %v987 = vpop.permute.xlu0 %986
      %989 = vset.pattern.permute.xlu0 1
      %990 = vperm.xlu0 %989, %v699
      %v991 = vpop.permute.xlu0 %990
      %v993 = vmul.f32 %v953, %v963
      %v994 = vmul.f32 %v929, %v963
      %v995 = vmul.f32 %v954, %v967
      %v996 = vmul.f32 %v930, %v967
      %v997 = vmul.f32 %v955, %v971
      %v998 = vmul.f32 %v931, %v971
      %v999 = vmul.f32 %v956, %v975
      %v1000 = vmul.f32 %v932, %v975
      %v1001 = vmul.f32 %v957, %v979
      %v1002 = vmul.f32 %v933, %v979
      %v1003 = vmul.f32 %v958, %v983
      %v1004 = vmul.f32 %v934, %v983
      %v1005 = vmul.f32 %v959, %v987
      %v1006 = vmul.f32 %v935, %v987
      %v1007 = vmul.f32 %v960, %v991
      %v1008 = vmul.f32 %v936, %v991
      %v1009 = vlaneseq
      %v1010 = vshrl.u32 %v1009, 7
      %v1011 = vsub.s32 1, %v1010
      %v1012 = vrot.slane %v700, %v1011
      %v1013 = vlaneseq
      %v1014 = vshrl.u32 %v1013, 7
      %v1015 = vsub.s32 1, %v1014
      %v1016 = vrot.slane %v701, %v1015
      %v1017 = vmul.f32 %v993, %v1012
      %v1018 = vmul.f32 %v994, %v1016
      %v1019 = vmul.f32 %v995, %v1012
      %v1020 = vmul.f32 %v996, %v1016
      %v1021 = vmul.f32 %v997, %v1012
      %v1022 = vmul.f32 %v998, %v1016
      %v1023 = vmul.f32 %v999, %v1012
      %v1024 = vmul.f32 %v1000, %v1016
      %v1025 = vmul.f32 %v1001, %v1012
      %v1026 = vmul.f32 %v1002, %v1016
      %v1027 = vmul.f32 %v1003, %v1012
      %v1028 = vmul.f32 %v1004, %v1016
      %v1029 = vmul.f32 %v1005, %v1012
      %v1030 = vmul.f32 %v1006, %v1016
      %v1031 = vmul.f32 %v1007, %v1012
      %v1032 = vmul.f32 %v1008, %v1016
      %v1033 = vadd.f32 %v873, %v1017
      %v1034 = vadd.f32 %v874, %v1018
      %v1035 = vadd.f32 %v875, %v1019
      %v1036 = vadd.f32 %v876, %v1020
      %v1037 = vadd.f32 %v877, %v1021
      %v1038 = vadd.f32 %v878, %v1022
      %v1039 = vadd.f32 %v879, %v1023
      %v1040 = vadd.f32 %v880, %v1024
      %v1041 = vadd.f32 %v881, %v1025
      %v1042 = vadd.f32 %v882, %v1026
      %v1043 = vadd.f32 %v883, %v1027
      %v1044 = vadd.f32 %v884, %v1028
      %v1045 = vadd.f32 %v885, %v1029
      %v1046 = vadd.f32 %v886, %v1030
      %v1047 = vadd.f32 %v887, %v1031
      %v1048 = vadd.f32 %v888, %v1032
      %1049 = vrot.lane.b32.xlu0 %v677, 15
      %v1050 = vpop.permute.xlu0 %1049
      %1051 = vrot.lane.b32.xlu0 %v679, 15
      %v1052 = vpop.permute.xlu0 %1051
      %1053 = vrot.lane.b32.xlu0 %v681, 15
      %v1054 = vpop.permute.xlu0 %1053
      %1055 = vrot.lane.b32.xlu0 %v683, 15
      %v1056 = vpop.permute.xlu0 %1055
      %1057 = vrot.lane.b32.xlu0 %v685, 15
      %v1058 = vpop.permute.xlu0 %1057
      %1059 = vrot.lane.b32.xlu0 %v687, 15
      %v1060 = vpop.permute.xlu0 %1059
      %1061 = vrot.lane.b32.xlu0 %v689, 15
      %v1062 = vpop.permute.xlu0 %1061
      %1063 = vrot.lane.b32.xlu0 %v691, 15
      %v1064 = vpop.permute.xlu0 %1063
      %1073 = vrot.lane.b32.xlu0 %v676, 15
      %v1074 = vpop.permute.xlu0 %1073
      %1075 = vrot.lane.b32.xlu0 %v678, 15
      %v1076 = vpop.permute.xlu0 %1075
      %1077 = vrot.lane.b32.xlu0 %v680, 15
      %v1078 = vpop.permute.xlu0 %1077
      %1079 = vrot.lane.b32.xlu0 %v682, 15
      %v1080 = vpop.permute.xlu0 %1079
      %1081 = vrot.lane.b32.xlu0 %v684, 15
      %v1082 = vpop.permute.xlu0 %1081
      %1083 = vrot.lane.b32.xlu0 %v686, 15
      %v1084 = vpop.permute.xlu0 %1083
      %1085 = vrot.lane.b32.xlu0 %v688, 15
      %v1086 = vpop.permute.xlu0 %1085
      %1087 = vrot.lane.b32.xlu0 %v690, 15
      %v1088 = vpop.permute.xlu0 %1087
      %vm1089 = vcmask 121856
      %v1090 = vsel %vm1089, %v1074, %v1050
      %v1091 = vsel %vm1089, %v1076, %v1052
      %v1092 = vsel %vm1089, %v1078, %v1054
      %v1093 = vsel %vm1089, %v1080, %v1056
      %v1094 = vsel %vm1089, %v1082, %v1058
      %v1095 = vsel %vm1089, %v1084, %v1060
      %v1096 = vsel %vm1089, %v1086, %v1062
      %v1097 = vsel %vm1089, %v1088, %v1064
      %v1114 = vsel %vm1089, %v1050, %v1074
      %v1115 = vsel %vm1089, %v1052, %v1076
      %v1116 = vsel %vm1089, %v1054, %v1078
      %v1117 = vsel %vm1089, %v1056, %v1080
      %v1118 = vsel %vm1089, %v1058, %v1082
      %v1119 = vsel %vm1089, %v1060, %v1084
      %v1120 = vsel %vm1089, %v1062, %v1086
      %v1121 = vsel %vm1089, %v1064, %v1088
      %1122 = vset.pattern.permute.xlu0 2
      %1123 = vperm.xlu0 %1122, %v692
      %v1124 = vpop.permute.xlu0 %1123
      %1126 = vset.pattern.permute.xlu0 2
      %1127 = vperm.xlu0 %1126, %v693
      %v1128 = vpop.permute.xlu0 %1127
      %1130 = vset.pattern.permute.xlu0 2
      %1131 = vperm.xlu0 %1130, %v694
      %v1132 = vpop.permute.xlu0 %1131
      %1134 = vset.pattern.permute.xlu0 2
      %1135 = vperm.xlu0 %1134, %v695
      %v1136 = vpop.permute.xlu0 %1135
      %1138 = vset.pattern.permute.xlu0 2
      %1139 = vperm.xlu0 %1138, %v696
      %v1140 = vpop.permute.xlu0 %1139
      %1142 = vset.pattern.permute.xlu0 2
      %1143 = vperm.xlu0 %1142, %v697
      %v1144 = vpop.permute.xlu0 %1143
      %1146 = vset.pattern.permute.xlu0 2
      %1147 = vperm.xlu0 %1146, %v698
      %v1148 = vpop.permute.xlu0 %1147
      %1150 = vset.pattern.permute.xlu0 2
      %1151 = vperm.xlu0 %1150, %v699
      %v1152 = vpop.permute.xlu0 %1151
      %v1154 = vmul.f32 %v1114, %v1124
      %v1155 = vmul.f32 %v1090, %v1124
      %v1156 = vmul.f32 %v1115, %v1128
      %v1157 = vmul.f32 %v1091, %v1128
      %v1158 = vmul.f32 %v1116, %v1132
      %v1159 = vmul.f32 %v1092, %v1132
      %v1160 = vmul.f32 %v1117, %v1136
      %v1161 = vmul.f32 %v1093, %v1136
      %v1162 = vmul.f32 %v1118, %v1140
      %v1163 = vmul.f32 %v1094, %v1140
      %v1164 = vmul.f32 %v1119, %v1144
      %v1165 = vmul.f32 %v1095, %v1144
      %v1166 = vmul.f32 %v1120, %v1148
      %v1167 = vmul.f32 %v1096, %v1148
      %v1168 = vmul.f32 %v1121, %v1152
      %v1169 = vmul.f32 %v1097, %v1152
      %v1170 = vlaneseq
      %v1171 = vshrl.u32 %v1170, 7
      %v1172 = vsub.s32 2, %v1171
      %v1173 = vrot.slane %v700, %v1172
      %v1174 = vlaneseq
      %v1175 = vshrl.u32 %v1174, 7
      %v1176 = vsub.s32 2, %v1175
      %v1177 = vrot.slane %v701, %v1176
      %v1178 = vmul.f32 %v1154, %v1173
      %v1179 = vmul.f32 %v1155, %v1177
      %v1180 = vmul.f32 %v1156, %v1173
      %v1181 = vmul.f32 %v1157, %v1177
      %v1182 = vmul.f32 %v1158, %v1173
      %v1183 = vmul.f32 %v1159, %v1177
      %v1184 = vmul.f32 %v1160, %v1173
      %v1185 = vmul.f32 %v1161, %v1177
      %v1186 = vmul.f32 %v1162, %v1173
      %v1187 = vmul.f32 %v1163, %v1177
      %v1188 = vmul.f32 %v1164, %v1173
      %v1189 = vmul.f32 %v1165, %v1177
      %v1190 = vmul.f32 %v1166, %v1173
      %v1191 = vmul.f32 %v1167, %v1177
      %v1192 = vmul.f32 %v1168, %v1173
      %v1193 = vmul.f32 %v1169, %v1177
      %v1194 = vadd.f32 %v1033, %v1178
      %v1195 = vadd.f32 %v1034, %v1179
      %v1196 = vadd.f32 %v1035, %v1180
      %v1197 = vadd.f32 %v1036, %v1181
      %v1198 = vadd.f32 %v1037, %v1182
      %v1199 = vadd.f32 %v1038, %v1183
      %v1200 = vadd.f32 %v1039, %v1184
      %v1201 = vadd.f32 %v1040, %v1185
      %v1202 = vadd.f32 %v1041, %v1186
      %v1203 = vadd.f32 %v1042, %v1187
      %v1204 = vadd.f32 %v1043, %v1188
      %v1205 = vadd.f32 %v1044, %v1189
      %v1206 = vadd.f32 %v1045, %v1190
      %v1207 = vadd.f32 %v1046, %v1191
      %v1208 = vadd.f32 %v1047, %v1192
      %v1209 = vadd.f32 %v1048, %v1193
      %1210 = vrot.lane.b32.xlu0 %v677, 1
      %v1211 = vpop.permute.xlu0 %1210
      %1212 = vrot.lane.b32.xlu0 %v679, 1
      %v1213 = vpop.permute.xlu0 %1212
      %1214 = vrot.lane.b32.xlu0 %v681, 1
      %v1215 = vpop.permute.xlu0 %1214
      %1216 = vrot.lane.b32.xlu0 %v683, 1
      %v1217 = vpop.permute.xlu0 %1216
      %1218 = vrot.lane.b32.xlu0 %v685, 1
      %v1219 = vpop.permute.xlu0 %1218
      %1220 = vrot.lane.b32.xlu0 %v687, 1
      %v1221 = vpop.permute.xlu0 %1220
      %1222 = vrot.lane.b32.xlu0 %v689, 1
      %v1223 = vpop.permute.xlu0 %1222
      %1224 = vrot.lane.b32.xlu0 %v691, 1
      %v1225 = vpop.permute.xlu0 %1224
      %1234 = vrot.lane.b32.xlu0 %v676, 1
      %v1235 = vpop.permute.xlu0 %1234
      %1236 = vrot.lane.b32.xlu0 %v678, 1
      %v1237 = vpop.permute.xlu0 %1236
      %1238 = vrot.lane.b32.xlu0 %v680, 1
      %v1239 = vpop.permute.xlu0 %1238
      %1240 = vrot.lane.b32.xlu0 %v682, 1
      %v1241 = vpop.permute.xlu0 %1240
      %1242 = vrot.lane.b32.xlu0 %v684, 1
      %v1243 = vpop.permute.xlu0 %1242
      %1244 = vrot.lane.b32.xlu0 %v686, 1
      %v1245 = vpop.permute.xlu0 %1244
      %1246 = vrot.lane.b32.xlu0 %v688, 1
      %v1247 = vpop.permute.xlu0 %1246
      %1248 = vrot.lane.b32.xlu0 %v690, 1
      %v1249 = vpop.permute.xlu0 %1248
      %vm1250 = vcmask 7168
      %v1251 = vsel %vm1250, %v1235, %v1211
      %v1252 = vsel %vm1250, %v1237, %v1213
      %v1253 = vsel %vm1250, %v1239, %v1215
      %v1254 = vsel %vm1250, %v1241, %v1217
      %v1255 = vsel %vm1250, %v1243, %v1219
      %v1256 = vsel %vm1250, %v1245, %v1221
      %v1257 = vsel %vm1250, %v1247, %v1223
      %v1258 = vsel %vm1250, %v1249, %v1225
      %v1275 = vsel %vm1250, %v1211, %v1235
      %v1276 = vsel %vm1250, %v1213, %v1237
      %v1277 = vsel %vm1250, %v1215, %v1239
      %v1278 = vsel %vm1250, %v1217, %v1241
      %v1279 = vsel %vm1250, %v1219, %v1243
      %v1280 = vsel %vm1250, %v1221, %v1245
      %v1281 = vsel %vm1250, %v1223, %v1247
      %v1282 = vsel %vm1250, %v1225, %v1249
      %1283 = vset.pattern.permute.xlu0 3
      %1284 = vperm.xlu0 %1283, %v692
      %v1285 = vpop.permute.xlu0 %1284
      %1287 = vset.pattern.permute.xlu0 3
      %1288 = vperm.xlu0 %1287, %v693
      %v1289 = vpop.permute.xlu0 %1288
      %1291 = vset.pattern.permute.xlu0 3
      %1292 = vperm.xlu0 %1291, %v694
      %v1293 = vpop.permute.xlu0 %1292
      %1295 = vset.pattern.permute.xlu0 3
      %1296 = vperm.xlu0 %1295, %v695
      %v1297 = vpop.permute.xlu0 %1296
      %1299 = vset.pattern.permute.xlu0 3
      %1300 = vperm.xlu0 %1299, %v696
      %v1301 = vpop.permute.xlu0 %1300
      %1303 = vset.pattern.permute.xlu0 3
      %1304 = vperm.xlu0 %1303, %v697
      %v1305 = vpop.permute.xlu0 %1304
      %1307 = vset.pattern.permute.xlu0 3
      %1308 = vperm.xlu0 %1307, %v698
      %v1309 = vpop.permute.xlu0 %1308
      %1311 = vset.pattern.permute.xlu0 3
      %1312 = vperm.xlu0 %1311, %v699
      %v1313 = vpop.permute.xlu0 %1312
      %v1315 = vmul.f32 %v1275, %v1285
      %v1316 = vmul.f32 %v1251, %v1285
      %v1317 = vmul.f32 %v1276, %v1289
      %v1318 = vmul.f32 %v1252, %v1289
      %v1319 = vmul.f32 %v1277, %v1293
      %v1320 = vmul.f32 %v1253, %v1293
      %v1321 = vmul.f32 %v1278, %v1297
      %v1322 = vmul.f32 %v1254, %v1297
      %v1323 = vmul.f32 %v1279, %v1301
      %v1324 = vmul.f32 %v1255, %v1301
      %v1325 = vmul.f32 %v1280, %v1305
      %v1326 = vmul.f32 %v1256, %v1305
      %v1327 = vmul.f32 %v1281, %v1309
      %v1328 = vmul.f32 %v1257, %v1309
      %v1329 = vmul.f32 %v1282, %v1313
      %v1330 = vmul.f32 %v1258, %v1313
      %v1331 = vlaneseq
      %v1332 = vshrl.u32 %v1331, 7
      %v1333 = vsub.s32 3, %v1332
      %v1334 = vrot.slane %v700, %v1333
      %v1335 = vlaneseq
      %v1336 = vshrl.u32 %v1335, 7
      %v1337 = vsub.s32 3, %v1336
      %v1338 = vrot.slane %v701, %v1337
      %v1339 = vmul.f32 %v1315, %v1334
      %v1340 = vmul.f32 %v1316, %v1338
      %v1341 = vmul.f32 %v1317, %v1334
      %v1342 = vmul.f32 %v1318, %v1338
      %v1343 = vmul.f32 %v1319, %v1334
      %v1344 = vmul.f32 %v1320, %v1338
      %v1345 = vmul.f32 %v1321, %v1334
      %v1346 = vmul.f32 %v1322, %v1338
      %v1347 = vmul.f32 %v1323, %v1334
      %v1348 = vmul.f32 %v1324, %v1338
      %v1349 = vmul.f32 %v1325, %v1334
      %v1350 = vmul.f32 %v1326, %v1338
      %v1351 = vmul.f32 %v1327, %v1334
      %v1352 = vmul.f32 %v1328, %v1338
      %v1353 = vmul.f32 %v1329, %v1334
      %v1354 = vmul.f32 %v1330, %v1338
      %v1355 = vadd.f32 %v1194, %v1339
      %v1356 = vadd.f32 %v1195, %v1340
      %v1357 = vadd.f32 %v1196, %v1341
      %v1358 = vadd.f32 %v1197, %v1342
      %v1359 = vadd.f32 %v1198, %v1343
      %v1360 = vadd.f32 %v1199, %v1344
      %v1361 = vadd.f32 %v1200, %v1345
      %v1362 = vadd.f32 %v1201, %v1346
      %v1363 = vadd.f32 %v1202, %v1347
      %v1364 = vadd.f32 %v1203, %v1348
      %v1365 = vadd.f32 %v1204, %v1349
      %v1366 = vadd.f32 %v1205, %v1350
      %v1367 = vadd.f32 %v1206, %v1351
      %v1368 = vadd.f32 %v1207, %v1352
      %v1369 = vadd.f32 %v1208, %v1353
      %v1370 = vadd.f32 %v1209, %v1354
      %1371 = vset.pattern.permute.xlu0 4
      %1372 = vperm.xlu0 %1371, %v692
      %v1373 = vpop.permute.xlu0 %1372
      %1375 = vset.pattern.permute.xlu0 4
      %1376 = vperm.xlu0 %1375, %v693
      %v1377 = vpop.permute.xlu0 %1376
      %1379 = vset.pattern.permute.xlu0 4
      %1380 = vperm.xlu0 %1379, %v694
      %v1381 = vpop.permute.xlu0 %1380
      %1383 = vset.pattern.permute.xlu0 4
      %1384 = vperm.xlu0 %1383, %v695
      %v1385 = vpop.permute.xlu0 %1384
      %1387 = vset.pattern.permute.xlu0 4
      %1388 = vperm.xlu0 %1387, %v696
      %v1389 = vpop.permute.xlu0 %1388
      %1391 = vset.pattern.permute.xlu0 4
      %1392 = vperm.xlu0 %1391, %v697
      %v1393 = vpop.permute.xlu0 %1392
      %1395 = vset.pattern.permute.xlu0 4
      %1396 = vperm.xlu0 %1395, %v698
      %v1397 = vpop.permute.xlu0 %1396
      %1399 = vset.pattern.permute.xlu0 4
      %1400 = vperm.xlu0 %1399, %v699
      %v1401 = vpop.permute.xlu0 %1400
      %v1403 = vmul.f32 %v676, %v1373
      %v1404 = vmul.f32 %v677, %v1373
      %v1405 = vmul.f32 %v678, %v1377
      %v1406 = vmul.f32 %v679, %v1377
      %v1407 = vmul.f32 %v680, %v1381
      %v1408 = vmul.f32 %v681, %v1381
      %v1409 = vmul.f32 %v682, %v1385
      %v1410 = vmul.f32 %v683, %v1385
      %v1411 = vmul.f32 %v684, %v1389
      %v1412 = vmul.f32 %v685, %v1389
      %v1413 = vmul.f32 %v686, %v1393
      %v1414 = vmul.f32 %v687, %v1393
      %v1415 = vmul.f32 %v688, %v1397
      %v1416 = vmul.f32 %v689, %v1397
      %v1417 = vmul.f32 %v690, %v1401
      %v1418 = vmul.f32 %v691, %v1401
      %v1419 = vadd.f32 %v1355, %v1403
      %v1420 = vadd.f32 %v1356, %v1404
      %v1421 = vadd.f32 %v1357, %v1405
      %v1422 = vadd.f32 %v1358, %v1406
      %v1423 = vadd.f32 %v1359, %v1407
      %v1424 = vadd.f32 %v1360, %v1408
      %v1425 = vadd.f32 %v1361, %v1409
      %v1426 = vadd.f32 %v1362, %v1410
      %v1427 = vadd.f32 %v1363, %v1411
      %v1428 = vadd.f32 %v1364, %v1412
      %v1429 = vadd.f32 %v1365, %v1413
      %v1430 = vadd.f32 %v1366, %v1414
      %v1431 = vadd.f32 %v1367, %v1415
      %v1432 = vadd.f32 %v1368, %v1416
      %v1433 = vadd.f32 %v1369, %v1417
      %v1434 = vadd.f32 %v1370, %v1418
      %1435 = vrot.lane.b32.xlu0 %v676, 127
      %v1436 = vpop.permute.xlu0 %1435
      %1437 = vrot.lane.b32.xlu0 %v677, 127
      %v1438 = vpop.permute.xlu0 %1437
      %1439 = vrot.lane.b32.xlu0 %v678, 127
      %v1440 = vpop.permute.xlu0 %1439
      %1441 = vrot.lane.b32.xlu0 %v679, 127
      %v1442 = vpop.permute.xlu0 %1441
      %1443 = vrot.lane.b32.xlu0 %v680, 127
      %v1444 = vpop.permute.xlu0 %1443
      %1445 = vrot.lane.b32.xlu0 %v681, 127
      %v1446 = vpop.permute.xlu0 %1445
      %1447 = vrot.lane.b32.xlu0 %v682, 127
      %v1448 = vpop.permute.xlu0 %1447
      %1449 = vrot.lane.b32.xlu0 %v683, 127
      %v1450 = vpop.permute.xlu0 %1449
      %1451 = vrot.lane.b32.xlu0 %v684, 127
      %v1452 = vpop.permute.xlu0 %1451
      %1453 = vrot.lane.b32.xlu0 %v685, 127
      %v1454 = vpop.permute.xlu0 %1453
      %1455 = vrot.lane.b32.xlu0 %v686, 127
      %v1456 = vpop.permute.xlu0 %1455
      %1457 = vrot.lane.b32.xlu0 %v687, 127
      %v1458 = vpop.permute.xlu0 %1457
      %1459 = vrot.lane.b32.xlu0 %v688, 127
      %v1460 = vpop.permute.xlu0 %1459
      %1461 = vrot.lane.b32.xlu0 %v689, 127
      %v1462 = vpop.permute.xlu0 %1461
      %1463 = vrot.lane.b32.xlu0 %v690, 127
      %v1464 = vpop.permute.xlu0 %1463
      %1465 = vrot.lane.b32.xlu0 %v691, 127
      %v1466 = vpop.permute.xlu0 %1465
      %vm1467 = vcmask 1039360
      %v1468 = vsel %vm1467, %v1436, %v1438
      %v1469 = vsel %vm1467, %v1440, %v1442
      %v1470 = vsel %vm1467, %v1444, %v1446
      %v1471 = vsel %vm1467, %v1448, %v1450
      %v1472 = vsel %vm1467, %v1452, %v1454
      %v1473 = vsel %vm1467, %v1456, %v1458
      %v1474 = vsel %vm1467, %v1460, %v1462
      %v1475 = vsel %vm1467, %v1464, %v1466
      %v1500 = vsel %vm1467, %v1438, %v1436
      %v1501 = vsel %vm1467, %v1442, %v1440
      %v1502 = vsel %vm1467, %v1446, %v1444
      %v1503 = vsel %vm1467, %v1450, %v1448
      %v1504 = vsel %vm1467, %v1454, %v1452
      %v1505 = vsel %vm1467, %v1458, %v1456
      %v1506 = vsel %vm1467, %v1462, %v1460
      %v1507 = vsel %vm1467, %v1466, %v1464
      %1508 = vset.pattern.permute.xlu0 5
      %1509 = vperm.xlu0 %1508, %v692
      %v1510 = vpop.permute.xlu0 %1509
      %1512 = vset.pattern.permute.xlu0 5
      %1513 = vperm.xlu0 %1512, %v693
      %v1514 = vpop.permute.xlu0 %1513
      %1516 = vset.pattern.permute.xlu0 5
      %1517 = vperm.xlu0 %1516, %v694
      %v1518 = vpop.permute.xlu0 %1517
      %1520 = vset.pattern.permute.xlu0 5
      %1521 = vperm.xlu0 %1520, %v695
      %v1522 = vpop.permute.xlu0 %1521
      %1524 = vset.pattern.permute.xlu0 5
      %1525 = vperm.xlu0 %1524, %v696
      %v1526 = vpop.permute.xlu0 %1525
      %1528 = vset.pattern.permute.xlu0 5
      %1529 = vperm.xlu0 %1528, %v697
      %v1530 = vpop.permute.xlu0 %1529
      %1532 = vset.pattern.permute.xlu0 5
      %1533 = vperm.xlu0 %1532, %v698
      %v1534 = vpop.permute.xlu0 %1533
      %1536 = vset.pattern.permute.xlu0 5
      %1537 = vperm.xlu0 %1536, %v699
      %v1538 = vpop.permute.xlu0 %1537
      %v1540 = vmul.f32 %v1468, %v1510
      %v1541 = vmul.f32 %v1500, %v1510
      %v1542 = vmul.f32 %v1469, %v1514
      %v1543 = vmul.f32 %v1501, %v1514
      %v1544 = vmul.f32 %v1470, %v1518
      %v1545 = vmul.f32 %v1502, %v1518
      %v1546 = vmul.f32 %v1471, %v1522
      %v1547 = vmul.f32 %v1503, %v1522
      %v1548 = vmul.f32 %v1472, %v1526
      %v1549 = vmul.f32 %v1504, %v1526
      %v1550 = vmul.f32 %v1473, %v1530
      %v1551 = vmul.f32 %v1505, %v1530
      %v1552 = vmul.f32 %v1474, %v1534
      %v1553 = vmul.f32 %v1506, %v1534
      %v1554 = vmul.f32 %v1475, %v1538
      %v1555 = vmul.f32 %v1507, %v1538
      %v1556 = vlaneseq
      %v1557 = vshrl.u32 %v1556, 7
      %v1558 = vsub.s32 5, %v1557
      %v1559 = vrot.slane %v700, %v1558
      %v1560 = vlaneseq
      %v1561 = vshrl.u32 %v1560, 7
      %v1562 = vsub.s32 5, %v1561
      %v1563 = vrot.slane %v701, %v1562
      %v1564 = vmul.f32 %v1540, %v1559
      %v1565 = vmul.f32 %v1541, %v1563
      %v1566 = vmul.f32 %v1542, %v1559
      %v1567 = vmul.f32 %v1543, %v1563
      %v1568 = vmul.f32 %v1544, %v1559
      %v1569 = vmul.f32 %v1545, %v1563
      %v1570 = vmul.f32 %v1546, %v1559
      %v1571 = vmul.f32 %v1547, %v1563
      %v1572 = vmul.f32 %v1548, %v1559
      %v1573 = vmul.f32 %v1549, %v1563
      %v1574 = vmul.f32 %v1550, %v1559
      %v1575 = vmul.f32 %v1551, %v1563
      %v1576 = vmul.f32 %v1552, %v1559
      %v1577 = vmul.f32 %v1553, %v1563
      %v1578 = vmul.f32 %v1554, %v1559
      %v1579 = vmul.f32 %v1555, %v1563
      %v1580 = vadd.f32 %v1419, %v1564
      %v1581 = vadd.f32 %v1420, %v1565
      %v1582 = vadd.f32 %v1421, %v1566
      %v1583 = vadd.f32 %v1422, %v1567
      %v1584 = vadd.f32 %v1423, %v1568
      %v1585 = vadd.f32 %v1424, %v1569
      %v1586 = vadd.f32 %v1425, %v1570
      %v1587 = vadd.f32 %v1426, %v1571
      %v1588 = vadd.f32 %v1427, %v1572
      %v1589 = vadd.f32 %v1428, %v1573
      %v1590 = vadd.f32 %v1429, %v1574
      %v1591 = vadd.f32 %v1430, %v1575
      %v1592 = vadd.f32 %v1431, %v1576
      %v1593 = vadd.f32 %v1432, %v1577
      %v1594 = vadd.f32 %v1433, %v1578
      %v1595 = vadd.f32 %v1434, %v1579
      %1596 = vrot.lane.b32.xlu0 %v676, 113
      %v1597 = vpop.permute.xlu0 %1596
      %1598 = vrot.lane.b32.xlu0 %v677, 113
      %v1599 = vpop.permute.xlu0 %1598
      %1600 = vrot.lane.b32.xlu0 %v678, 113
      %v1601 = vpop.permute.xlu0 %1600
      %1602 = vrot.lane.b32.xlu0 %v679, 113
      %v1603 = vpop.permute.xlu0 %1602
      %1604 = vrot.lane.b32.xlu0 %v680, 113
      %v1605 = vpop.permute.xlu0 %1604
      %1606 = vrot.lane.b32.xlu0 %v681, 113
      %v1607 = vpop.permute.xlu0 %1606
      %1608 = vrot.lane.b32.xlu0 %v682, 113
      %v1609 = vpop.permute.xlu0 %1608
      %1610 = vrot.lane.b32.xlu0 %v683, 113
      %v1611 = vpop.permute.xlu0 %1610
      %1612 = vrot.lane.b32.xlu0 %v684, 113
      %v1613 = vpop.permute.xlu0 %1612
      %1614 = vrot.lane.b32.xlu0 %v685, 113
      %v1615 = vpop.permute.xlu0 %1614
      %1616 = vrot.lane.b32.xlu0 %v686, 113
      %v1617 = vpop.permute.xlu0 %1616
      %1618 = vrot.lane.b32.xlu0 %v687, 113
      %v1619 = vpop.permute.xlu0 %1618
      %1620 = vrot.lane.b32.xlu0 %v688, 113
      %v1621 = vpop.permute.xlu0 %1620
      %1622 = vrot.lane.b32.xlu0 %v689, 113
      %v1623 = vpop.permute.xlu0 %1622
      %1624 = vrot.lane.b32.xlu0 %v690, 113
      %v1625 = vpop.permute.xlu0 %1624
      %1626 = vrot.lane.b32.xlu0 %v691, 113
      %v1627 = vpop.permute.xlu0 %1626
      %vm1628 = vcmask 924672
      %v1629 = vsel %vm1628, %v1597, %v1599
      %v1630 = vsel %vm1628, %v1601, %v1603
      %v1631 = vsel %vm1628, %v1605, %v1607
      %v1632 = vsel %vm1628, %v1609, %v1611
      %v1633 = vsel %vm1628, %v1613, %v1615
      %v1634 = vsel %vm1628, %v1617, %v1619
      %v1635 = vsel %vm1628, %v1621, %v1623
      %v1636 = vsel %vm1628, %v1625, %v1627
      %v1661 = vsel %vm1628, %v1599, %v1597
      %v1662 = vsel %vm1628, %v1603, %v1601
      %v1663 = vsel %vm1628, %v1607, %v1605
      %v1664 = vsel %vm1628, %v1611, %v1609
      %v1665 = vsel %vm1628, %v1615, %v1613
      %v1666 = vsel %vm1628, %v1619, %v1617
      %v1667 = vsel %vm1628, %v1623, %v1621
      %v1668 = vsel %vm1628, %v1627, %v1625
      %1669 = vset.pattern.permute.xlu0 6
      %1670 = vperm.xlu0 %1669, %v692
      %v1671 = vpop.permute.xlu0 %1670
      %1673 = vset.pattern.permute.xlu0 6
      %1674 = vperm.xlu0 %1673, %v693
      %v1675 = vpop.permute.xlu0 %1674
      %1677 = vset.pattern.permute.xlu0 6
      %1678 = vperm.xlu0 %1677, %v694
      %v1679 = vpop.permute.xlu0 %1678
      %1681 = vset.pattern.permute.xlu0 6
      %1682 = vperm.xlu0 %1681, %v695
      %v1683 = vpop.permute.xlu0 %1682
      %1685 = vset.pattern.permute.xlu0 6
      %1686 = vperm.xlu0 %1685, %v696
      %v1687 = vpop.permute.xlu0 %1686
      %1689 = vset.pattern.permute.xlu0 6
      %1690 = vperm.xlu0 %1689, %v697
      %v1691 = vpop.permute.xlu0 %1690
      %1693 = vset.pattern.permute.xlu0 6
      %1694 = vperm.xlu0 %1693, %v698
      %v1695 = vpop.permute.xlu0 %1694
      %1697 = vset.pattern.permute.xlu0 6
      %1698 = vperm.xlu0 %1697, %v699
      %v1699 = vpop.permute.xlu0 %1698
      %v1701 = vmul.f32 %v1629, %v1671
      %v1702 = vmul.f32 %v1661, %v1671
      %v1703 = vmul.f32 %v1630, %v1675
      %v1704 = vmul.f32 %v1662, %v1675
      %v1705 = vmul.f32 %v1631, %v1679
      %v1706 = vmul.f32 %v1663, %v1679
      %v1707 = vmul.f32 %v1632, %v1683
      %v1708 = vmul.f32 %v1664, %v1683
      %v1709 = vmul.f32 %v1633, %v1687
      %v1710 = vmul.f32 %v1665, %v1687
      %v1711 = vmul.f32 %v1634, %v1691
      %v1712 = vmul.f32 %v1666, %v1691
      %v1713 = vmul.f32 %v1635, %v1695
      %v1714 = vmul.f32 %v1667, %v1695
      %v1715 = vmul.f32 %v1636, %v1699
      %v1716 = vmul.f32 %v1668, %v1699
      %v1717 = vlaneseq
      %v1718 = vshrl.u32 %v1717, 7
      %v1719 = vsub.s32 6, %v1718
      %v1720 = vrot.slane %v700, %v1719
      %v1721 = vlaneseq
      %v1722 = vshrl.u32 %v1721, 7
      %v1723 = vsub.s32 6, %v1722
      %v1724 = vrot.slane %v701, %v1723
      %v1725 = vmul.f32 %v1701, %v1720
      %v1726 = vmul.f32 %v1702, %v1724
      %v1727 = vmul.f32 %v1703, %v1720
      %v1728 = vmul.f32 %v1704, %v1724
      %v1729 = vmul.f32 %v1705, %v1720
      %v1730 = vmul.f32 %v1706, %v1724
      %v1731 = vmul.f32 %v1707, %v1720
      %v1732 = vmul.f32 %v1708, %v1724
      %v1733 = vmul.f32 %v1709, %v1720
      %v1734 = vmul.f32 %v1710, %v1724
      %v1735 = vmul.f32 %v1711, %v1720
      %v1736 = vmul.f32 %v1712, %v1724
      %v1737 = vmul.f32 %v1713, %v1720
      %v1738 = vmul.f32 %v1714, %v1724
      %v1739 = vmul.f32 %v1715, %v1720
      %v1740 = vmul.f32 %v1716, %v1724
      %v1741 = vadd.f32 %v1580, %v1725
      %v1742 = vadd.f32 %v1581, %v1726
      %v1743 = vadd.f32 %v1582, %v1727
      %v1744 = vadd.f32 %v1583, %v1728
      %v1745 = vadd.f32 %v1584, %v1729
      %v1746 = vadd.f32 %v1585, %v1730
      %v1747 = vadd.f32 %v1586, %v1731
      %v1748 = vadd.f32 %v1587, %v1732
      %v1749 = vadd.f32 %v1588, %v1733
      %v1750 = vadd.f32 %v1589, %v1734
      %v1751 = vadd.f32 %v1590, %v1735
      %v1752 = vadd.f32 %v1591, %v1736
      %v1753 = vadd.f32 %v1592, %v1737
      %v1754 = vadd.f32 %v1593, %v1738
      %v1755 = vadd.f32 %v1594, %v1739
      %v1756 = vadd.f32 %v1595, %v1740
      %1757 = vrot.lane.b32.xlu0 %v676, 112
      %v1758 = vpop.permute.xlu0 %1757
      %1759 = vrot.lane.b32.xlu0 %v677, 112
      %v1760 = vpop.permute.xlu0 %1759
      %1761 = vrot.lane.b32.xlu0 %v678, 112
      %v1762 = vpop.permute.xlu0 %1761
      %1763 = vrot.lane.b32.xlu0 %v679, 112
      %v1764 = vpop.permute.xlu0 %1763
      %1765 = vrot.lane.b32.xlu0 %v680, 112
      %v1766 = vpop.permute.xlu0 %1765
      %1767 = vrot.lane.b32.xlu0 %v681, 112
      %v1768 = vpop.permute.xlu0 %1767
      %1769 = vrot.lane.b32.xlu0 %v682, 112
      %v1770 = vpop.permute.xlu0 %1769
      %1771 = vrot.lane.b32.xlu0 %v683, 112
      %v1772 = vpop.permute.xlu0 %1771
      %1773 = vrot.lane.b32.xlu0 %v684, 112
      %v1774 = vpop.permute.xlu0 %1773
      %1775 = vrot.lane.b32.xlu0 %v685, 112
      %v1776 = vpop.permute.xlu0 %1775
      %1777 = vrot.lane.b32.xlu0 %v686, 112
      %v1778 = vpop.permute.xlu0 %1777
      %1779 = vrot.lane.b32.xlu0 %v687, 112
      %v1780 = vpop.permute.xlu0 %1779
      %1781 = vrot.lane.b32.xlu0 %v688, 112
      %v1782 = vpop.permute.xlu0 %1781
      %1783 = vrot.lane.b32.xlu0 %v689, 112
      %v1784 = vpop.permute.xlu0 %1783
      %1785 = vrot.lane.b32.xlu0 %v690, 112
      %v1786 = vpop.permute.xlu0 %1785
      %1787 = vrot.lane.b32.xlu0 %v691, 112
      %v1788 = vpop.permute.xlu0 %1787
      %vm1789 = vcmask 916480
      %v1790 = vsel %vm1789, %v1758, %v1760
      %v1791 = vsel %vm1789, %v1762, %v1764
      %v1792 = vsel %vm1789, %v1766, %v1768
      %v1793 = vsel %vm1789, %v1770, %v1772
      %v1794 = vsel %vm1789, %v1774, %v1776
      %v1795 = vsel %vm1789, %v1778, %v1780
      %v1796 = vsel %vm1789, %v1782, %v1784
      %v1797 = vsel %vm1789, %v1786, %v1788
      %v1822 = vsel %vm1789, %v1760, %v1758
      %v1823 = vsel %vm1789, %v1764, %v1762
      %v1824 = vsel %vm1789, %v1768, %v1766
      %v1825 = vsel %vm1789, %v1772, %v1770
      %v1826 = vsel %vm1789, %v1776, %v1774
      %v1827 = vsel %vm1789, %v1780, %v1778
      %v1828 = vsel %vm1789, %v1784, %v1782
      %v1829 = vsel %vm1789, %v1788, %v1786
      %1830 = vset.pattern.permute.xlu0 7
      %1831 = vperm.xlu0 %1830, %v692
      %v1832 = vpop.permute.xlu0 %1831
      %1834 = vset.pattern.permute.xlu0 7
      %1835 = vperm.xlu0 %1834, %v693
      %v1836 = vpop.permute.xlu0 %1835
      %1838 = vset.pattern.permute.xlu0 7
      %1839 = vperm.xlu0 %1838, %v694
      %v1840 = vpop.permute.xlu0 %1839
      %1842 = vset.pattern.permute.xlu0 7
      %1843 = vperm.xlu0 %1842, %v695
      %v1844 = vpop.permute.xlu0 %1843
      %1846 = vset.pattern.permute.xlu0 7
      %1847 = vperm.xlu0 %1846, %v696
      %v1848 = vpop.permute.xlu0 %1847
      %1850 = vset.pattern.permute.xlu0 7
      %1851 = vperm.xlu0 %1850, %v697
      %v1852 = vpop.permute.xlu0 %1851
      %1854 = vset.pattern.permute.xlu0 7
      %1855 = vperm.xlu0 %1854, %v698
      %v1856 = vpop.permute.xlu0 %1855
      %1858 = vset.pattern.permute.xlu0 7
      %1859 = vperm.xlu0 %1858, %v699
      %v1860 = vpop.permute.xlu0 %1859
      %v1862 = vmul.f32 %v1790, %v1832
      %v1863 = vmul.f32 %v1822, %v1832
      %v1864 = vmul.f32 %v1791, %v1836
      %v1865 = vmul.f32 %v1823, %v1836
      %v1866 = vmul.f32 %v1792, %v1840
      %v1867 = vmul.f32 %v1824, %v1840
      %v1868 = vmul.f32 %v1793, %v1844
      %v1869 = vmul.f32 %v1825, %v1844
      %v1870 = vmul.f32 %v1794, %v1848
      %v1871 = vmul.f32 %v1826, %v1848
      %v1872 = vmul.f32 %v1795, %v1852
      %v1873 = vmul.f32 %v1827, %v1852
      %v1874 = vmul.f32 %v1796, %v1856
      %v1875 = vmul.f32 %v1828, %v1856
      %v1876 = vmul.f32 %v1797, %v1860
      %v1877 = vmul.f32 %v1829, %v1860
      %v1878 = vlaneseq
      %v1879 = vshrl.u32 %v1878, 7
      %v1880 = vsub.s32 7, %v1879
      %v1881 = vrot.slane %v700, %v1880
      %v1882 = vlaneseq
      %v1883 = vshrl.u32 %v1882, 7
      %v1884 = vsub.s32 7, %v1883
      %v1885 = vrot.slane %v701, %v1884
      %v1886 = vmul.f32 %v1862, %v1881
      %v1887 = vmul.f32 %v1863, %v1885
      %v1888 = vmul.f32 %v1864, %v1881
      %v1889 = vmul.f32 %v1865, %v1885
      %v1890 = vmul.f32 %v1866, %v1881
      %v1891 = vmul.f32 %v1867, %v1885
      %v1892 = vmul.f32 %v1868, %v1881
      %v1893 = vmul.f32 %v1869, %v1885
      %v1894 = vmul.f32 %v1870, %v1881
      %v1895 = vmul.f32 %v1871, %v1885
      %v1896 = vmul.f32 %v1872, %v1881
      %v1897 = vmul.f32 %v1873, %v1885
      %v1898 = vmul.f32 %v1874, %v1881
      %v1899 = vmul.f32 %v1875, %v1885
      %v1900 = vmul.f32 %v1876, %v1881
      %v1901 = vmul.f32 %v1877, %v1885
      %v1902 = vadd.f32 %v1741, %v1886
      %v1903 = vadd.f32 %v1742, %v1887
      %v1904 = vadd.f32 %v1743, %v1888
      %v1905 = vadd.f32 %v1744, %v1889
      %v1906 = vadd.f32 %v1745, %v1890
      %v1907 = vadd.f32 %v1746, %v1891
      %v1908 = vadd.f32 %v1747, %v1892
      %v1909 = vadd.f32 %v1748, %v1893
      %v1910 = vadd.f32 %v1749, %v1894
      %v1911 = vadd.f32 %v1750, %v1895
      %v1912 = vadd.f32 %v1751, %v1896
      %v1913 = vadd.f32 %v1752, %v1897
      %v1914 = vadd.f32 %v1753, %v1898
      %v1915 = vadd.f32 %v1754, %v1899
      %v1916 = vadd.f32 %v1755, %v1900
      %v1917 = vadd.f32 %v1756, %v1901
      %1918 = vrot.lane.b32.xlu0 %v676, 111
      %v1919 = vpop.permute.xlu0 %1918
      %1920 = vrot.lane.b32.xlu0 %v677, 111
      %v1921 = vpop.permute.xlu0 %1920
      %1922 = vrot.lane.b32.xlu0 %v678, 111
      %v1923 = vpop.permute.xlu0 %1922
      %1924 = vrot.lane.b32.xlu0 %v679, 111
      %v1925 = vpop.permute.xlu0 %1924
      %1926 = vrot.lane.b32.xlu0 %v680, 111
      %v1927 = vpop.permute.xlu0 %1926
      %1928 = vrot.lane.b32.xlu0 %v681, 111
      %v1929 = vpop.permute.xlu0 %1928
      %1930 = vrot.lane.b32.xlu0 %v682, 111
      %v1931 = vpop.permute.xlu0 %1930
      %1932 = vrot.lane.b32.xlu0 %v683, 111
      %v1933 = vpop.permute.xlu0 %1932
      %1934 = vrot.lane.b32.xlu0 %v684, 111
      %v1935 = vpop.permute.xlu0 %1934
      %1936 = vrot.lane.b32.xlu0 %v685, 111
      %v1937 = vpop.permute.xlu0 %1936
      %1938 = vrot.lane.b32.xlu0 %v686, 111
      %v1939 = vpop.permute.xlu0 %1938
      %1940 = vrot.lane.b32.xlu0 %v687, 111
      %v1941 = vpop.permute.xlu0 %1940
      %1942 = vrot.lane.b32.xlu0 %v688, 111
      %v1943 = vpop.permute.xlu0 %1942
      %1944 = vrot.lane.b32.xlu0 %v689, 111
      %v1945 = vpop.permute.xlu0 %1944
      %1946 = vrot.lane.b32.xlu0 %v690, 111
      %v1947 = vpop.permute.xlu0 %1946
      %1948 = vrot.lane.b32.xlu0 %v691, 111
      %v1949 = vpop.permute.xlu0 %1948
      %vm1950 = vcmask 908288
      %v1951 = vsel %vm1950, %v1919, %v1921
      %v1952 = vsel %vm1950, %v1923, %v1925
      %v1953 = vsel %vm1950, %v1927, %v1929
      %v1954 = vsel %vm1950, %v1931, %v1933
      %v1955 = vsel %vm1950, %v1935, %v1937
      %v1956 = vsel %vm1950, %v1939, %v1941
      %v1957 = vsel %vm1950, %v1943, %v1945
      %v1958 = vsel %vm1950, %v1947, %v1949
      %v1983 = vsel %vm1950, %v1921, %v1919
      %v1984 = vsel %vm1950, %v1925, %v1923
      %v1985 = vsel %vm1950, %v1929, %v1927
      %v1986 = vsel %vm1950, %v1933, %v1931
      %v1987 = vsel %vm1950, %v1937, %v1935
      %v1988 = vsel %vm1950, %v1941, %v1939
      %v1989 = vsel %vm1950, %v1945, %v1943
      %v1990 = vsel %vm1950, %v1949, %v1947
      %1991 = vset.pattern.permute.xlu0 8
      %1992 = vperm.xlu0 %1991, %v692
      %v1993 = vpop.permute.xlu0 %1992
      %1995 = vset.pattern.permute.xlu0 8
      %1996 = vperm.xlu0 %1995, %v693
      %v1997 = vpop.permute.xlu0 %1996
      %1999 = vset.pattern.permute.xlu0 8
      %2000 = vperm.xlu0 %1999, %v694
      %v2001 = vpop.permute.xlu0 %2000
      %2003 = vset.pattern.permute.xlu0 8
      %2004 = vperm.xlu0 %2003, %v695
      %v2005 = vpop.permute.xlu0 %2004
      %2007 = vset.pattern.permute.xlu0 8
      %2008 = vperm.xlu0 %2007, %v696
      %v2009 = vpop.permute.xlu0 %2008
      %2011 = vset.pattern.permute.xlu0 8
      %2012 = vperm.xlu0 %2011, %v697
      %v2013 = vpop.permute.xlu0 %2012
      %2015 = vset.pattern.permute.xlu0 8
      %2016 = vperm.xlu0 %2015, %v698
      %v2017 = vpop.permute.xlu0 %2016
      %2019 = vset.pattern.permute.xlu0 8
      %2020 = vperm.xlu0 %2019, %v699
      %v2021 = vpop.permute.xlu0 %2020
      %v2023 = vmul.f32 %v1951, %v1993
      %v2024 = vmul.f32 %v1983, %v1993
      %v2025 = vmul.f32 %v1952, %v1997
      %v2026 = vmul.f32 %v1984, %v1997
      %v2027 = vmul.f32 %v1953, %v2001
      %v2028 = vmul.f32 %v1985, %v2001
      %v2029 = vmul.f32 %v1954, %v2005
      %v2030 = vmul.f32 %v1986, %v2005
      %v2031 = vmul.f32 %v1955, %v2009
      %v2032 = vmul.f32 %v1987, %v2009
      %v2033 = vmul.f32 %v1956, %v2013
      %v2034 = vmul.f32 %v1988, %v2013
      %v2035 = vmul.f32 %v1957, %v2017
      %v2036 = vmul.f32 %v1989, %v2017
      %v2037 = vmul.f32 %v1958, %v2021
      %v2038 = vmul.f32 %v1990, %v2021
      %v2039 = vlaneseq
      %v2040 = vshrl.u32 %v2039, 7
      %v2041 = vsub.s32 0, %v2040
      %v2042 = vrot.slane %v702, %v2041
      %v2043 = vlaneseq
      %v2044 = vshrl.u32 %v2043, 7
      %v2045 = vsub.s32 0, %v2044
      %v2046 = vrot.slane %v703, %v2045
      %v2047 = vmul.f32 %v2023, %v2042
      %v2048 = vmul.f32 %v2024, %v2046
      %v2049 = vmul.f32 %v2025, %v2042
      %v2050 = vmul.f32 %v2026, %v2046
      %v2051 = vmul.f32 %v2027, %v2042
      %v2052 = vmul.f32 %v2028, %v2046
      %v2053 = vmul.f32 %v2029, %v2042
      %v2054 = vmul.f32 %v2030, %v2046
      %v2055 = vmul.f32 %v2031, %v2042
      %v2056 = vmul.f32 %v2032, %v2046
      %v2057 = vmul.f32 %v2033, %v2042
      %v2058 = vmul.f32 %v2034, %v2046
      %v2059 = vmul.f32 %v2035, %v2042
      %v2060 = vmul.f32 %v2036, %v2046
      %v2061 = vmul.f32 %v2037, %v2042
      %v2062 = vmul.f32 %v2038, %v2046
      %v2063 = vadd.f32 %v1902, %v2047
      %v2064 = vadd.f32 %v1903, %v2048
      %v2065 = vadd.f32 %v1904, %v2049
      %v2066 = vadd.f32 %v1905, %v2050
      %v2067 = vadd.f32 %v1906, %v2051
      %v2068 = vadd.f32 %v1907, %v2052
      %v2069 = vadd.f32 %v1908, %v2053
      %v2070 = vadd.f32 %v1909, %v2054
      %v2071 = vadd.f32 %v1910, %v2055
      %v2072 = vadd.f32 %v1911, %v2056
      %v2073 = vadd.f32 %v1912, %v2057
      %v2074 = vadd.f32 %v1913, %v2058
      %v2075 = vadd.f32 %v1914, %v2059
      %v2076 = vadd.f32 %v1915, %v2060
      %v2077 = vadd.f32 %v1916, %v2061
      %v2078 = vadd.f32 %v1917, %v2062
      %v2079 = vld [vmem:[%s4] sm:$0xff]
      %v2080 = vld [vmem:[%s4 + $0x8] sm:$0xff]
      %v2081 = vld [vmem:[%s4 + $0x10] sm:$0xff]
      %v2082 = vld [vmem:[%s4 + $0x18] sm:$0xff]
      %v2083 = vld [vmem:[%s4 + $0x20] sm:$0xff]
      %v2084 = vld [vmem:[%s4 + $0x28] sm:$0xff]
      %v2085 = vld [vmem:[%s4 + $0x30] sm:$0xff]
      %v2086 = vld [vmem:[%s4 + $0x38] sm:$0xff]
      %2088 = vset.pattern.permute.xlu0 0
      %2089 = vperm.xlu0 %2088, %v2079
      %v2090 = vpop.permute.xlu0 %2089
      %2093 = vset.pattern.permute.xlu0 0
      %2094 = vperm.xlu0 %2093, %v2080
      %v2095 = vpop.permute.xlu0 %2094
      %2098 = vset.pattern.permute.xlu0 0
      %2099 = vperm.xlu0 %2098, %v2081
      %v2100 = vpop.permute.xlu0 %2099
      %2103 = vset.pattern.permute.xlu0 0
      %2104 = vperm.xlu0 %2103, %v2082
      %v2105 = vpop.permute.xlu0 %2104
      %2108 = vset.pattern.permute.xlu0 0
      %2109 = vperm.xlu0 %2108, %v2083
      %v2110 = vpop.permute.xlu0 %2109
      %2113 = vset.pattern.permute.xlu0 0
      %2114 = vperm.xlu0 %2113, %v2084
      %v2115 = vpop.permute.xlu0 %2114
      %2118 = vset.pattern.permute.xlu0 0
      %2119 = vperm.xlu0 %2118, %v2085
      %v2120 = vpop.permute.xlu0 %2119
      %2123 = vset.pattern.permute.xlu0 0
      %2124 = vperm.xlu0 %2123, %v2086
      %v2125 = vpop.permute.xlu0 %2124
      %v2127 = vadd.f32 %v2063, %v2090
      %v2128 = vadd.f32 %v2064, %v2090
      %v2129 = vadd.f32 %v2065, %v2095
      %v2130 = vadd.f32 %v2066, %v2095
      %v2131 = vadd.f32 %v2067, %v2100
      %v2132 = vadd.f32 %v2068, %v2100
      %v2133 = vadd.f32 %v2069, %v2105
      %v2134 = vadd.f32 %v2070, %v2105
      %v2135 = vadd.f32 %v2071, %v2110
      %v2136 = vadd.f32 %v2072, %v2110
      %v2137 = vadd.f32 %v2073, %v2115
      %v2138 = vadd.f32 %v2074, %v2115
      %v2139 = vadd.f32 %v2075, %v2120
      %v2140 = vadd.f32 %v2076, %v2120
      %v2141 = vadd.f32 %v2077, %v2125
      %v2142 = vadd.f32 %v2078, %v2125
      %v2143 = vadd.f32 %v2127, 3.0
      %v2144 = vadd.f32 %v2128, 3.0
      %v2145 = vadd.f32 %v2129, 3.0
      %v2146 = vadd.f32 %v2130, 3.0
      %v2147 = vadd.f32 %v2131, 3.0
      %v2148 = vadd.f32 %v2132, 3.0
      %v2149 = vadd.f32 %v2133, 3.0
      %v2150 = vadd.f32 %v2134, 3.0
      %v2151 = vadd.f32 %v2135, 3.0
      %v2152 = vadd.f32 %v2136, 3.0
      %v2153 = vadd.f32 %v2137, 3.0
      %v2154 = vadd.f32 %v2138, 3.0
      %v2155 = vadd.f32 %v2139, 3.0
      %v2156 = vadd.f32 %v2140, 3.0
      %v2157 = vadd.f32 %v2141, 3.0
      %v2158 = vadd.f32 %v2142, 3.0
      %v2159 = vmax.f32 %v2143, 0.0
      %v2160 = vmax.f32 %v2144, 0.0
      %v2161 = vmax.f32 %v2145, 0.0
      %v2162 = vmax.f32 %v2146, 0.0
      %v2163 = vmax.f32 %v2147, 0.0
      %v2164 = vmax.f32 %v2148, 0.0
      %v2165 = vmax.f32 %v2149, 0.0
      %v2166 = vmax.f32 %v2150, 0.0
      %v2167 = vmax.f32 %v2151, 0.0
      %v2168 = vmax.f32 %v2152, 0.0
      %v2169 = vmax.f32 %v2153, 0.0
      %v2170 = vmax.f32 %v2154, 0.0
      %v2171 = vmax.f32 %v2155, 0.0
      %v2172 = vmax.f32 %v2156, 0.0
      %v2173 = vmax.f32 %v2157, 0.0
      %v2174 = vmax.f32 %v2158, 0.0
      %v2175 = vmin.f32 %v2159, 6.0
      %v2176 = vmin.f32 %v2160, 6.0
      %v2177 = vmin.f32 %v2161, 6.0
      %v2178 = vmin.f32 %v2162, 6.0
      %v2179 = vmin.f32 %v2163, 6.0
      %v2180 = vmin.f32 %v2164, 6.0
      %v2181 = vmin.f32 %v2165, 6.0
      %v2182 = vmin.f32 %v2166, 6.0
      %v2183 = vmin.f32 %v2167, 6.0
      %v2184 = vmin.f32 %v2168, 6.0
      %v2185 = vmin.f32 %v2169, 6.0
      %v2186 = vmin.f32 %v2170, 6.0
      %v2187 = vmin.f32 %v2171, 6.0
      %v2188 = vmin.f32 %v2172, 6.0
      %v2189 = vmin.f32 %v2173, 6.0
      %v2190 = vmin.f32 %v2174, 6.0
      %v2191 = vmul.f32 %v2127, %v2175
      %v2192 = vmul.f32 %v2128, %v2176
      %v2193 = vmul.f32 %v2129, %v2177
      %v2194 = vmul.f32 %v2130, %v2178
      %v2195 = vmul.f32 %v2131, %v2179
      %v2196 = vmul.f32 %v2132, %v2180
      %v2197 = vmul.f32 %v2133, %v2181
      %v2198 = vmul.f32 %v2134, %v2182
      %v2199 = vmul.f32 %v2135, %v2183
      %v2200 = vmul.f32 %v2136, %v2184
      %v2201 = vmul.f32 %v2137, %v2185
      %v2202 = vmul.f32 %v2138, %v2186
      %v2203 = vmul.f32 %v2139, %v2187
      %v2204 = vmul.f32 %v2140, %v2188
      %v2205 = vmul.f32 %v2141, %v2189
      %v2206 = vmul.f32 %v2142, %v2190
      %v2207 = vmul.f32 %v2191, 0.16666667
      %v2208 = vmul.f32 %v2192, 0.16666667
      %v2209 = vmul.f32 %v2193, 0.16666667
      %v2210 = vmul.f32 %v2194, 0.16666667
      %v2211 = vmul.f32 %v2195, 0.16666667
      %v2212 = vmul.f32 %v2196, 0.16666667
      %v2213 = vmul.f32 %v2197, 0.16666667
      %v2214 = vmul.f32 %v2198, 0.16666667
      %v2215 = vmul.f32 %v2199, 0.16666667
      %v2216 = vmul.f32 %v2200, 0.16666667
      %v2217 = vmul.f32 %v2201, 0.16666667
      %v2218 = vmul.f32 %v2202, 0.16666667
      %v2219 = vmul.f32 %v2203, 0.16666667
      %v2220 = vmul.f32 %v2204, 0.16666667
      %v2221 = vmul.f32 %v2205, 0.16666667
      %v2222 = vmul.f32 %v2206, 0.16666667
      %v2223 = vadd.f32 %v2207, %v2208
      %2224 = vadd.xlane.f32.xlu0 %v2223
      %v2225 = vpop.xlane.xlu0 %2224
      %v2226 = vadd.f32 %v2209, %v2210
      %2227 = vadd.xlane.f32.xlu0 %v2226
      %v2228 = vpop.xlane.xlu0 %2227
      %v2229 = vadd.f32 %v2211, %v2212
      %2230 = vadd.xlane.f32.xlu0 %v2229
      %v2231 = vpop.xlane.xlu0 %2230
      %v2232 = vadd.f32 %v2213, %v2214
      %2233 = vadd.xlane.f32.xlu0 %v2232
      %v2234 = vpop.xlane.xlu0 %2233
      %v2235 = vadd.f32 %v2215, %v2216
      %2236 = vadd.xlane.f32.xlu0 %v2235
      %v2237 = vpop.xlane.xlu0 %2236
      %v2238 = vadd.f32 %v2217, %v2218
      %2239 = vadd.xlane.f32.xlu0 %v2238
      %v2240 = vpop.xlane.xlu0 %2239
      %v2241 = vadd.f32 %v2219, %v2220
      %2242 = vadd.xlane.f32.xlu0 %v2241
      %v2243 = vpop.xlane.xlu0 %2242
      %v2244 = vadd.f32 %v2221, %v2222
      %2245 = vadd.xlane.f32.xlu0 %v2244
      %v2246 = vpop.xlane.xlu0 %2245
      %v2247 = vmul.f32 %v2225, 0.00390625
      %v2248 = vmul.f32 %v2228, 0.00390625
      %v2249 = vmul.f32 %v2231, 0.00390625
      %v2250 = vmul.f32 %v2234, 0.00390625
      %v2251 = vmul.f32 %v2237, 0.00390625
      %v2252 = vmul.f32 %v2240, 0.00390625
      %v2253 = vmul.f32 %v2243, 0.00390625
      %v2254 = vmul.f32 %v2246, 0.00390625
      %v2255 = vld [vmem:[%s6] sm:$0xff]
      %v2256 = vld [vmem:[%s6 + $0x8] sm:$0xff]
      %v2257 = vld [vmem:[%s6 + $0x10] sm:$0xff]
      %v2258 = vld [vmem:[%s6 + $0x18] sm:$0xff]
      %v2259 = vld [vmem:[%s6 + $0x20] sm:$0xff]
      %v2260 = vld [vmem:[%s6 + $0x28] sm:$0xff]
      %v2261 = vld [vmem:[%s6 + $0x30] sm:$0xff]
      %v2262 = vld [vmem:[%s6 + $0x38] sm:$0xff]
      %v2263 = vmul.f32 %v2247, %v2255
      %v2264 = vmul.f32 %v2248, %v2256
      %v2265 = vmul.f32 %v2249, %v2257
      %v2266 = vmul.f32 %v2250, %v2258
      %v2267 = vmul.f32 %v2251, %v2259
      %v2268 = vmul.f32 %v2252, %v2260
      %v2269 = vmul.f32 %v2253, %v2261
      %v2270 = vmul.f32 %v2254, %v2262
      %v2271 = vsel %vm474, %v2263, 0.0
      %v2272 = vsel %vm474, %v2264, 0.0
      %v2273 = vadd.f32 %v2271, %v2272
      %v2274 = vsel %vm474, %v2265, 0.0
      %v2275 = vadd.f32 %v2273, %v2274
      %v2276 = vsel %vm474, %v2266, 0.0
      %v2277 = vadd.f32 %v2275, %v2276
      %v2278 = vsel %vm474, %v2267, 0.0
      %v2279 = vadd.f32 %v2277, %v2278
      %v2280 = vsel %vm474, %v2268, 0.0
      %v2281 = vadd.f32 %v2279, %v2280
      %v2282 = vsel %vm474, %v2269, 0.0
      %v2283 = vadd.f32 %v2281, %v2282
      %v2284 = vsel %vm474, %v2270, 0.0
      %v2285 = vadd.f32 %v2283, %v2284
      %v2286 = vrot.slane %v2285, 4
      %v2287 = vadd.f32 %v2285, %v2286
      %v2288 = vrot.slane %v2287, 2
      %v2289 = vadd.f32 %v2287, %v2288
      %v2290 = vrot.slane %v2289, 1
      %v2291 = vadd.f32 %v2289, %v2290
      %v2292 = vld [vmem:[%s7] sm:$0x1]
      %v2293 = vadd.f32 %v2291, %v2292
      %v2294 = vmax.f32 %v2293, 0.0
      %v2295 = vld [vmem:[%s8] sm:$0xff]
      %v2296 = vld [vmem:[%s8 + $0x8] sm:$0xff]
      %v2297 = vld [vmem:[%s8 + $0x10] sm:$0xff]
      %v2298 = vld [vmem:[%s8 + $0x18] sm:$0xff]
      %v2299 = vld [vmem:[%s8 + $0x20] sm:$0xff]
      %v2300 = vld [vmem:[%s8 + $0x28] sm:$0xff]
      %v2301 = vld [vmem:[%s8 + $0x30] sm:$0xff]
      %v2302 = vld [vmem:[%s8 + $0x38] sm:$0xff]
      %v2303 = vlaneseq
      %v2304 = vshrl.u32 %v2303, 7
      %v2305 = vsub.s32 0, %v2304
      %v2306 = vrot.slane %v2294, %v2305
      %v2307 = vmul.f32 %v2295, %v2306
      %v2308 = vmul.f32 %v2296, %v2306
      %v2309 = vmul.f32 %v2297, %v2306
      %v2310 = vmul.f32 %v2298, %v2306
      %v2311 = vmul.f32 %v2299, %v2306
      %v2312 = vmul.f32 %v2300, %v2306
      %v2313 = vmul.f32 %v2301, %v2306
      %v2314 = vmul.f32 %v2302, %v2306
      %v2315 = vsel %vm474, %v2307, 0.0
      %2316 = vadd.xlane.f32.xlu0 %v2315
      %v2317 = vpop.xlane.xlu0 %2316
      %v2318 = vsel %vm474, %v2308, 0.0
      %2319 = vadd.xlane.f32.xlu0 %v2318
      %v2320 = vpop.xlane.xlu0 %2319
      %v2321 = vsel %vm474, %v2309, 0.0
      %2322 = vadd.xlane.f32.xlu0 %v2321
      %v2323 = vpop.xlane.xlu0 %2322
      %v2324 = vsel %vm474, %v2310, 0.0
      %2325 = vadd.xlane.f32.xlu0 %v2324
      %v2326 = vpop.xlane.xlu0 %2325
      %v2327 = vsel %vm474, %v2311, 0.0
      %2328 = vadd.xlane.f32.xlu0 %v2327
      %v2329 = vpop.xlane.xlu0 %2328
      %v2330 = vsel %vm474, %v2312, 0.0
      %2331 = vadd.xlane.f32.xlu0 %v2330
      %v2332 = vpop.xlane.xlu0 %2331
      %v2333 = vsel %vm474, %v2313, 0.0
      %2334 = vadd.xlane.f32.xlu0 %v2333
      %v2335 = vpop.xlane.xlu0 %2334
      %v2336 = vsel %vm474, %v2314, 0.0
      %2337 = vadd.xlane.f32.xlu0 %v2336
      %v2338 = vpop.xlane.xlu0 %2337
      %v2339 = vld [vmem:[%s9] sm:$0xff]
      %v2340 = vld [vmem:[%s9 + $0x8] sm:$0xff]
      %v2341 = vld [vmem:[%s9 + $0x10] sm:$0xff]
      %v2342 = vld [vmem:[%s9 + $0x18] sm:$0xff]
      %v2343 = vld [vmem:[%s9 + $0x20] sm:$0xff]
      %v2344 = vld [vmem:[%s9 + $0x28] sm:$0xff]
      %v2345 = vld [vmem:[%s9 + $0x30] sm:$0xff]
      %v2346 = vld [vmem:[%s9 + $0x38] sm:$0xff]
      %v2347 = vadd.f32 %v2317, %v2339
      %v2348 = vadd.f32 %v2320, %v2340
      %v2349 = vadd.f32 %v2323, %v2341
      %v2350 = vadd.f32 %v2326, %v2342
      %v2351 = vadd.f32 %v2329, %v2343
      %v2352 = vadd.f32 %v2332, %v2344
      %v2353 = vadd.f32 %v2335, %v2345
      %v2354 = vadd.f32 %v2338, %v2346
      %v2355 = vadd.f32 %v2347, 3.0
      %v2356 = vadd.f32 %v2348, 3.0
      %v2357 = vadd.f32 %v2349, 3.0
      %v2358 = vadd.f32 %v2350, 3.0
      %v2359 = vadd.f32 %v2351, 3.0
      %v2360 = vadd.f32 %v2352, 3.0
      %v2361 = vadd.f32 %v2353, 3.0
      %v2362 = vadd.f32 %v2354, 3.0
      %v2363 = vmax.f32 %v2355, 0.0
      %v2364 = vmax.f32 %v2356, 0.0
      %v2365 = vmax.f32 %v2357, 0.0
      %v2366 = vmax.f32 %v2358, 0.0
      %v2367 = vmax.f32 %v2359, 0.0
      %v2368 = vmax.f32 %v2360, 0.0
      %v2369 = vmax.f32 %v2361, 0.0
      %v2370 = vmax.f32 %v2362, 0.0
      %v2371 = vmin.f32 %v2363, 6.0
      %v2372 = vmin.f32 %v2364, 6.0
      %v2373 = vmin.f32 %v2365, 6.0
      %v2374 = vmin.f32 %v2366, 6.0
      %v2375 = vmin.f32 %v2367, 6.0
      %v2376 = vmin.f32 %v2368, 6.0
      %v2377 = vmin.f32 %v2369, 6.0
      %v2378 = vmin.f32 %v2370, 6.0
      %v2379 = vmul.f32 %v2371, 0.16666667
      %v2380 = vmul.f32 %v2372, 0.16666667
      %v2381 = vmul.f32 %v2373, 0.16666667
      %v2382 = vmul.f32 %v2374, 0.16666667
      %v2383 = vmul.f32 %v2375, 0.16666667
      %v2384 = vmul.f32 %v2376, 0.16666667
      %v2385 = vmul.f32 %v2377, 0.16666667
      %v2386 = vmul.f32 %v2378, 0.16666667
      %2388 = vset.pattern.permute.xlu0 0
      %2389 = vperm.xlu0 %2388, %v2379
      %v2390 = vpop.permute.xlu0 %2389
      %2393 = vset.pattern.permute.xlu0 0
      %2394 = vperm.xlu0 %2393, %v2380
      %v2395 = vpop.permute.xlu0 %2394
      %2398 = vset.pattern.permute.xlu0 0
      %2399 = vperm.xlu0 %2398, %v2381
      %v2400 = vpop.permute.xlu0 %2399
      %2403 = vset.pattern.permute.xlu0 0
      %2404 = vperm.xlu0 %2403, %v2382
      %v2405 = vpop.permute.xlu0 %2404
      %2408 = vset.pattern.permute.xlu0 0
      %2409 = vperm.xlu0 %2408, %v2383
      %v2410 = vpop.permute.xlu0 %2409
      %2413 = vset.pattern.permute.xlu0 0
      %2414 = vperm.xlu0 %2413, %v2384
      %v2415 = vpop.permute.xlu0 %2414
      %2418 = vset.pattern.permute.xlu0 0
      %2419 = vperm.xlu0 %2418, %v2385
      %v2420 = vpop.permute.xlu0 %2419
      %2423 = vset.pattern.permute.xlu0 0
      %2424 = vperm.xlu0 %2423, %v2386
      %v2425 = vpop.permute.xlu0 %2424
      %v2427 = vmul.f32 %v2207, %v2390
      %v2428 = vmul.f32 %v2208, %v2390
      %v2429 = vmul.f32 %v2209, %v2395
      %v2430 = vmul.f32 %v2210, %v2395
      %v2431 = vmul.f32 %v2211, %v2400
      %v2432 = vmul.f32 %v2212, %v2400
      %v2433 = vmul.f32 %v2213, %v2405
      %v2434 = vmul.f32 %v2214, %v2405
      %v2435 = vmul.f32 %v2215, %v2410
      %v2436 = vmul.f32 %v2216, %v2410
      %v2437 = vmul.f32 %v2217, %v2415
      %v2438 = vmul.f32 %v2218, %v2415
      %v2439 = vmul.f32 %v2219, %v2420
      %v2440 = vmul.f32 %v2220, %v2420
      %v2441 = vmul.f32 %v2221, %v2425
      %v2442 = vmul.f32 %v2222, %v2425
      %v2443 = vld [vmem:[%s10] sm:$0xff]
      %v2444 = vld [vmem:[%s10 + $0x8] sm:$0xff]
      %v2445 = vld [vmem:[%s11] sm:$0xff]
      %v2446 = vld [vmem:[%s11 + $0x8] sm:$0xff]
      %2448 = vset.pattern.permute.xlu0 0
      %2449 = vperm.xlu0 %2448, %v2445
      %v2450 = vpop.permute.xlu0 %2449
      %2453 = vset.pattern.permute.xlu0 0
      %2454 = vperm.xlu0 %2453, %v2446
      %v2455 = vpop.permute.xlu0 %2454
      %vm2457 = vcmask 523264
      %v2459 = vsel %vm2457, %v2443, 0
      %v2462 = vsel %vm2457, %v2444, 0
      %2464 = vmatprep.subr.mxu0 %v2428
      %2465 = vmatpush1.msra.mxu0 %v2427
      %2466 = vmatprep.subr.mxu0 %v2430
      %2467 = vmatpush1.msra.mxu0 %v2429
      %2468 = vmatprep.subr.mxu0 %v2432
      %2469 = vmatpush1.msra.mxu0 %v2431
      %2470 = vmatprep.subr.mxu0 %v2434
      %2471 = vmatpush1.msra.mxu0 %v2433
      %2472 = vmatprep.subr.mxu0 %v2436
      %2473 = vmatpush1.msra.mxu0 %v2435
      %2474 = vmatprep.subr.mxu0 %v2438
      %2475 = vmatpush1.msra.mxu0 %v2437
      %2476 = vmatprep.subr.mxu0 %v2440
      %2477 = vmatpush1.msra.mxu0 %v2439
      %2478 = vmatprep.subr.mxu0 %v2442
      %2479 = vmatpush1.msra.mxu0 %v2441
      %2480 = vmatprep.subr.mxu0 0.0
      %2481 = vmatpush1.msra.mxu0 0.0
      %2482 = vmatprep.subr.mxu0 0.0
      %2483 = vmatpush1.msra.mxu0 0.0
      %2484 = vmatprep.subr.mxu0 0.0
      %2485 = vmatpush1.msra.mxu0 0.0
      %2486 = vmatprep.subr.mxu0 0.0
      %2487 = vmatpush1.msra.mxu0 0.0
      %2488 = vmatprep.subr.mxu0 0.0
      %2489 = vmatpush1.msra.mxu0 0.0
      %2490 = vmatprep.subr.mxu0 0.0
      %2491 = vmatpush1.msra.mxu0 0.0
      %2492 = vmatprep.subr.mxu0 0.0
      %2493 = vmatpush1.msra.mxu0 0.0
      %2494 = vmatprep.subr.mxu0 0.0
      %2495 = vmatpush1.msra.mxu0 0.0
      %2496 = vmatprep.subr.mxu0 0.0
      %2497 = vmatpush1.msra.mxu0 0.0
      %2498 = vmatprep.subr.mxu0 0.0
      %2499 = vmatpush1.msra.mxu0 0.0
      %2500 = vmatprep.subr.mxu0 0.0
      %2501 = vmatpush1.msra.mxu0 0.0
      %2502 = vmatprep.subr.mxu0 0.0
      %2503 = vmatpush1.msra.mxu0 0.0
      %2504 = vmatprep.subr.mxu0 0.0
      %2505 = vmatpush1.msra.mxu0 0.0
      %2506 = vmatprep.subr.mxu0 0.0
      %2507 = vmatpush1.msra.mxu0 0.0
      %2508 = vmatprep.subr.mxu0 0.0
      %2509 = vmatpush1.msra.mxu0 0.0
      %2510 = vmatprep.subr.mxu0 0.0
      %2511 = vmatpush1.msra.mxu0 0.0
      %2512 = vmatprep.subr.mxu0 0.0
      %2513 = vmatpush1.msra.mxu0 0.0
      %2514 = vmatprep.subr.mxu0 0.0
      %2515 = vmatpush1.msra.mxu0 0.0
      %2516 = vmatprep.subr.mxu0 0.0
      %2517 = vmatpush1.msra.mxu0 0.0
      %2518 = vmatprep.subr.mxu0 0.0
      %2519 = vmatpush1.msra.mxu0 0.0
      %2520 = vmatprep.subr.mxu0 0.0
      %2521 = vmatpush1.msra.mxu0 0.0
      %2522 = vmatprep.subr.mxu0 0.0
      %2523 = vmatpush1.msra.mxu0 0.0
      %2524 = vmatprep.subr.mxu0 0.0
      %2525 = vmatpush1.msra.mxu0 0.0
      %2526 = vmatprep.subr.mxu0 0.0
      %2527 = vmatpush1.msra.mxu0 0.0
      %2528 = vmatprep.mubr.f32.mxu0 0.0
      %2529 = vmatmul.mubr.f32.gmra.mrb[0].mxu0 %v2459
      %v2530 = vpop.f32.mrb[0].mxu0
      %v2531 = vadd.f32 %v2450, %v2530
      %v2532 = vpop.f32.mrb[0].mxu0
      %v2533 = vadd.f32 %v2450, %v2532
      %2534 = vmatprep.mubr.f32.mxu0 0.0
      %2535 = vmatmul.mubr.f32.gmra.mrb[0].mxu0 %v2462
      %v2536 = vpop.f32.mrb[0].mxu0
      %v2537 = vadd.f32 %v2455, %v2536
      %v2538 = vpop.f32.mrb[0].mxu0
      %v2539 = vadd.f32 %v2455, %v2538
      %2540 = vdwg.mxu0
      %v2541 = vadd.f32 %v2531, %v414
      %v2542 = vadd.f32 %v2533, %v415
      %v2543 = vadd.f32 %v2537, %v416
      %v2544 = vadd.f32 %v2539, %v417
      %2545 = vst [vmem:[%s413] sm:$0xff] %v2541
      %2546 = vst [vmem:[%s413 + $0x8] sm:$0xff] %v2542
      %2547 = vst [vmem:[%s413 + $0x10] sm:$0xff] %v2543
      %2548 = vst [vmem:[%s413 + $0x18] sm:$0xff] %v2544
      %p2549 = scmp.lt.s32.totalorder %s23, 1
      %s2550 = scalar_select %p2549, %s23, 1
      %s2551 = smul.addr %s2550, 4
      %s2552 = smul.addr %s2551, 8
      %s2553 = scalar_lea.vmem %s12, %s2552
      // Predicated region
      $region69: #{inverted_residual_forward.1} parent=67 // pred_check
        %p2554 = pneg %p298
      $region70: #{inverted_residual_forward.1} parent=67 // pred_check_branch
        %2556 = sbr.rel (%p2554) target = $region72
      $region71: #{inverted_residual_forward.1} parent=67 // pred_region
        _
      $region72: #{inverted_residual_forward.1} parent=67 // pred_fallthru
        _
    $region68: #{inverted_residual_forward.1} parent=5 // pred_fallthru
      _
    %p2557 = scmp.le.s32.totalorder 2, %s18
    // Predicated region
    $region73: #{inverted_residual_forward.1} parent=5 // pred_check
      %p2558 = pneg %p2557
    $region74: #{inverted_residual_forward.1} parent=5 // pred_check_branch
      %2560 = sbr.rel (%p2558) target = $region76
    $region75: #{inverted_residual_forward.1} parent=5 // pred_region
      %s2561 = ssub.s32 %s18, 2
      // Predicated region
      $region77: #{inverted_residual_forward.1} parent=75 // pred_check
        %p2562 = pneg %p304
      $region78: #{inverted_residual_forward.1} parent=75 // pred_check_branch
        %2564 = sbr.rel (%p2562) target = $region80
      $region79: #{inverted_residual_forward.1} parent=75 // pred_region
        %p2565 = scmp.lt.s32.totalorder %s24, 1
        %s2566 = scalar_select %p2565, %s24, 1
        %s2567 = smul.addr %s2566, 4
        %s2568 = smul.addr %s2567, 8
        %s2569 = scalar_lea.vmem %s12, %s2568
      $region80: #{inverted_residual_forward.1} parent=75 // pred_fallthru
        _
    $region76: #{inverted_residual_forward.1} parent=5 // pred_fallthru
      _
  $region6: #{inverted_residual_forward.1} parent=0 // loop_footer
    %s22 = sadd.s32 1, %s18
  $region7: #{inverted_residual_forward.1} parent=0 // loop_footer_branch
    %17 = sbr.rel target = $region3
  $region8: #{inverted_residual_forward.1} parent=0 // loop_exit
    _

</llo_original>
